<compile_context>
chip_gen: v6e
topology: v6e:2x2x1
jax: 0.10.0
libtpu: 0.0.40
codegen_flags: <defaults>
</compile_context>

<pallas_src>
import jax
import jax.numpy as jnp
from jax.experimental import pallas as pl
from jax.experimental.pallas import tpu as pltpu


def _round_up(x, m):
    return ((x + m - 1) // m) * m


def _vmem_capacity_bytes():
    try:
        return int(pltpu.get_tpu_info().vmem_capacity_bytes)
    except Exception:
        return 64 * 2**20          # conservative fallback (v7x-sized VMEM)


def _vmem_estimate(tile_m, tile_f, d_model, d_out, isz_x, isz_c, isz_o):
    """Working-set estimate for one grid step (double-buffered streams +
    f32 intermediates + accumulator + internal scratch margin)."""
    return (2 * tile_m * d_model * isz_x          # x tile (native dtype), 2-buffered
            + tile_m * d_model * isz_c            # in-kernel cast of x
            + 2 * d_model * 2 * tile_f * isz_c    # fused [W1|Wg] tile, 2-buffered
            + 2 * 2 * tile_f * 4                  # fused up-bias, 2-buffered
            + 2 * tile_f * d_out * isz_c          # W2 tile, 2-buffered
            + 2 * d_out * 4                       # b2
            + 2 * tile_m * d_out * isz_o          # out tile, 2-buffered
            + tile_m * d_out * 4                  # f32 accumulator scratch
            + tile_m * 2 * tile_f * 4             # f32 hg intermediate
            + 2 * tile_m * tile_f * 4             # f32 h / h*silu(g) intermediates
            + (2 << 20))                          # Mosaic internal scratch margin


def angle_glu_expert_kernel(x_ref, wup_ref, bup_ref, w2_ref, b2_ref,
                            o_ref, acc_ref):
    """One (token-tile i, ff-tile j) grid step.

    wup_ref[0] is the fused [W1_j | Wg_j] column slab, so up-projection +
    gate is a single MXU matmul; the j axis is a d_ff reduction into the
    f32 accumulator acc_ref.
    """
    j = pl.program_id(1)

    @pl.when(j == 0)
    def _init():
        acc_ref[...] = jnp.zeros_like(acc_ref)

    # x is DMA'd in its native dtype; cast to the MXU dtype on the VPU here
    # (avoids a separate full-HBM cast pass over the activations).
    x = x_ref[...].astype(wup_ref.dtype)                   # [tm, d_model]
    # fused up-projection + gate: [tm, d_model] @ [d_model, 2*tf] -> f32
    hg = jnp.dot(x, wup_ref[0], preferred_element_type=jnp.float32)
    hg = hg + bup_ref[0]                                   # f32 bias [1, 2*tf]
    tf = hg.shape[-1] // 2                                  # static
    h = hg[:, :tf]
    g = hg[:, tf:]
    # SiLU gate in f32 (sigmoid -> EUP slot)
    a = h * (g * jax.nn.sigmoid(g))                         # [tm, tf] f32

    # down-projection partial sum: [tm, tf] @ [tf, d_out]
    acc_ref[...] += jnp.dot(a.astype(w2_ref.dtype), w2_ref[0],
                            preferred_element_type=jnp.float32)

    @pl.when(j == pl.num_programs(1) - 1)
    def _finalize():
        o_ref[...] = (acc_ref[...] + b2_ref[...]).astype(o_ref.dtype)


def prepare_angle_glu_weights(w1, b1, wg, bg, w2, b2, *, tile_f=256,
                              compute_dtype=jnp.bfloat16):
    """One-time weight prep (call at weight-load time, NOT per forward):
    transpose to [in, out], zero-pad d_ff to a multiple of tile_f, fuse the
    W1/Wg column tiles, lay out per-ff-tile contiguous slabs, and cast MXU
    operands to compute_dtype."""
    d_ff, d_model = w1.shape
    d_out = w2.shape[0]
    tile_f = max(128, _round_up(min(tile_f, _round_up(d_ff, 128)), 128))
    d_ff_p = _round_up(d_ff, tile_f)
    nf = d_ff_p // tile_f
    pad_f = d_ff_p - d_ff

    w1t = jnp.pad(w1.T, ((0, 0), (0, pad_f)))               # [d_model, d_ff_p]
    wgt = jnp.pad(wg.T, ((0, 0), (0, pad_f)))
    w2t = jnp.pad(w2.T, ((0, pad_f), (0, 0)))               # [d_ff_p, d_out]
    b1p = jnp.pad(b1, (0, pad_f))
    bgp = jnp.pad(bg, (0, pad_f))

    # Per-ff-tile contiguous slabs: block j of w_up is [W1_j | Wg_j] with
    # shape (d_model, 2*tile_f) and lives contiguously in HBM, so each weight
    # DMA is one long burst (not a strided column slice).
    w_up = jnp.concatenate(
        [w1t.reshape(d_model, nf, tile_f), wgt.reshape(d_model, nf, tile_f)],
        axis=-1)                                            # (d_model, nf, 2*tf)
    w_up = jnp.transpose(w_up, (1, 0, 2)).astype(compute_dtype)  # (nf, d_model, 2*tf)

    b_up = jnp.concatenate(
        [b1p.reshape(nf, 1, tile_f), bgp.reshape(nf, 1, tile_f)],
        axis=-1).astype(jnp.float32)                        # (nf, 1, 2*tf)

    w_down = w2t.reshape(nf, tile_f, d_out).astype(compute_dtype)  # (nf, tf, d_out)
    b_down = b2.reshape(1, d_out).astype(jnp.float32)

    return dict(w_up=w_up, b_up=b_up, w_down=w_down, b_down=b_down,
                d_model=d_model, d_ff_p=d_ff_p, d_out=d_out,
                tile_f=tile_f, compute_dtype=compute_dtype)


def angle_glu_expert(x, params, *, tile_m=None):
    """x: [B, S, d_model] -> [B, S, d_model // 2]."""
    B, S, d_model = x.shape
    assert d_model == params["d_model"]
    d_out = params["d_out"]
    d_ff_p = params["d_ff_p"]
    tile_f = params["tile_f"]
    cdt = params["compute_dtype"]

    tokens = B * S
    isz_x = jnp.dtype(x.dtype).itemsize
    isz_c = jnp.dtype(cdt).itemsize
    isz_o = jnp.dtype(x.dtype).itemsize

    vmem_budget = int(0.9 * _vmem_capacity_bytes())

    # Token tile = arithmetic-intensity lever (weights are re-streamed once
    # per token tile).  Default large; shrink only for megacore / VMEM fit.
    if tile_m is None:
        tile_m = 1024
    tile_m = max(16, _round_up(tile_m, 16))          # bf16 sublane packing = 16
    tile_m = min(tile_m, _round_up(tokens, 16))
    # Megacore (v7x): give the "parallel" token axis >= 2 grid steps.
    if tile_m > 16 and (tokens + tile_m - 1) // tile_m < 2:
        tile_m = max(16, _round_up((tile_m + 1) // 2, 16))
    # Shrink the token tile until the working set fits the VMEM budget.
    while (tile_m > 128 and
           _vmem_estimate(tile_m, tile_f, d_model, d_out, isz_x, isz_c, isz_o)
           > vmem_budget):
        tile_m = max(128, _round_up(tile_m // 2, 16))

    tokens_p = _round_up(tokens, tile_m)             # pad instead of assert
    x2d = x.reshape(tokens, d_model)                 # native dtype, no cast here
    if tokens_p != tokens:
        x2d = jnp.pad(x2d, ((0, tokens_p - tokens), (0, 0)))

    grid = (tokens_p // tile_m, d_ff_p // tile_f)    # reduction axis innermost

    vmem_est = _vmem_estimate(tile_m, tile_f, d_model, d_out,
                              isz_x, isz_c, isz_o)
    vmem_limit = int(min(vmem_budget, max(32 * 2**20, int(1.3 * vmem_est))))

    n_token_tiles = tokens_p // tile_m
    weight_bytes = ((params["w_up"].size + params["w_down"].size) * isz_c
                    + (params["b_up"].size + params["b_down"].size) * 4)
    flops = 2 * tokens_p * d_model * (2 * d_ff_p) + 2 * tokens_p * d_ff_p * d_out
    bytes_accessed = (x2d.size * isz_x
                      + n_token_tiles * weight_bytes   # weights re-streamed per token tile
                      + tokens_p * d_out * isz_o)

    out2d = pl.pallas_call(
        angle_glu_expert_kernel,
        out_shape=jax.ShapeDtypeStruct((tokens_p, d_out), x.dtype),
        grid_spec=pltpu.PrefetchScalarGridSpec(
            num_scalar_prefetch=0,
            grid=grid,
            in_specs=[
                pl.BlockSpec((tile_m, d_model), lambda i, j: (i, 0)),            # x tile
                pl.BlockSpec((1, d_model, 2 * tile_f), lambda i, j: (j, 0, 0)),  # [W1|Wg]_j slab
                pl.BlockSpec((1, 1, 2 * tile_f), lambda i, j: (j, 0, 0)),        # [b1|bg]_j
                pl.BlockSpec((1, tile_f, d_out), lambda i, j: (j, 0, 0)),        # W2_j slab
                pl.BlockSpec((1, d_out), lambda i, j: (0, 0)),                   # b2
            ],
            out_specs=pl.BlockSpec((tile_m, d_out), lambda i, j: (i, 0)),
            scratch_shapes=[pltpu.VMEM((tile_m, d_out), jnp.float32)],
        ),
        compiler_params=pltpu.CompilerParams(
            dimension_semantics=("parallel", "arbitrary"),
            vmem_limit_bytes=vmem_limit),
        cost_estimate=pl.CostEstimate(
            flops=flops,
            transcendentals=2 * tokens_p * d_ff_p,   # sigmoid ~ exp + reciprocal
            bytes_accessed=bytes_accessed),
    )(x2d, params["w_up"], params["b_up"], params["w_down"], params["b_down"])

    return out2d[:tokens].reshape(B, S, d_out)


def angle_glu_expert_ref(x, w1, b1, wg, bg, w2, b2):
    """Plain-JAX reference mirroring the PyTorch forward."""
    h = jnp.einsum("bsd,fd->bsf", x, w1) + b1
    g = jnp.einsum("bsd,fd->bsf", x, wg) + bg
    a = h * (g * jax.nn.sigmoid(g))
    return jnp.einsum("bsf,of->bso", a, w2) + b2


if __name__ == "__main__":
    # Small shapes consistent with the module: linear1/gate: d_model->d_ff,
    # linear2: d_ff -> d_model // 2.
    B, S, d_model, d_ff = 2, 256, 256, 512
    d_out = d_model // 2

    key = jax.random.PRNGKey(0)
    kx, k1, kb1, kg, kbg, k2, kb2 = jax.random.split(key, 7)

    x = jax.random.normal(kx, (B, S, d_model), dtype=jnp.float32)

    # nn.Linear layout: W [out, in], b [out]
    scale1 = 1.0 / jnp.sqrt(d_model)
    scale2 = 1.0 / jnp.sqrt(d_ff)
    w1 = jax.random.uniform(k1, (d_ff, d_model), jnp.float32, -scale1, scale1)
    b1 = jax.random.uniform(kb1, (d_ff,), jnp.float32, -scale1, scale1)
    wg = jax.random.uniform(kg, (d_ff, d_model), jnp.float32, -scale1, scale1)
    bg = jax.random.uniform(kbg, (d_ff,), jnp.float32, -scale1, scale1)
    w2 = jax.random.uniform(k2, (d_out, d_ff), jnp.float32, -scale2, scale2)
    b2 = jax.random.uniform(kb2, (d_out,), jnp.float32, -scale2, scale2)

    ref = angle_glu_expert_ref(x, w1, b1, wg, bg, w2, b2)

    # (1) f32-compute path: tight numerical check of the kernel math.
    params_f32 = prepare_angle_glu_weights(
        w1, b1, wg, bg, w2, b2, tile_f=256, compute_dtype=jnp.float32)
    out_f32 = jax.block_until_ready(angle_glu_expert(x, params_f32, tile_m=128))
    assert out_f32.shape == (B, S, d_out)
    assert jnp.allclose(out_f32, ref, atol=1e-4, rtol=1e-4), "f32 path mismatch"

    # (2) bf16-operand / f32-accumulate performance path (auto tiling).
    params = prepare_angle_glu_weights(w1, b1, wg, bg, w2, b2, tile_f=256)
    out = jax.block_until_ready(angle_glu_expert(x, params))
    assert out.shape == (B, S, d_out)
    assert jnp.allclose(out, ref, atol=5e-2, rtol=5e-2), "bf16 path mismatch"

    print("KERNEL_OK")
</pallas_src>

<mosaic_0001>
module attributes {stable_mosaic.version = 11 : i64} {
  func.func @angle_glu_expert_kernel(%arg0: i32, %arg1: i32, %arg2: memref<128x256xf32, #tpu.memory_space<vmem>>, %arg3: memref<1x256x512xf32, #tpu.memory_space<vmem>>, %arg4: memref<1x1x512xf32, #tpu.memory_space<vmem>>, %arg5: memref<1x256x128xf32, #tpu.memory_space<vmem>>, %arg6: memref<1x128xf32, #tpu.memory_space<vmem>>, %arg7: memref<128x128xf32, #tpu.memory_space<vmem>>, %arg8: memref<128x128xf32, #tpu.memory_space<vmem>>) attributes {dimension_semantics = [#tpu.dimension_semantics<parallel>, #tpu.dimension_semantics<arbitrary>], iteration_bounds = array<i64: 4, 2>, scalar_prefetch = 0 : i64, scratch_operands = 1 : i64, tpu.core_type = #tpu.core_type<tc>, window_params = [{transform_indices = @transform_0, window_bounds = array<i64: 128, 256>}, {transform_indices = @transform_1, window_bounds = array<i64: 1, 256, 512>}, {transform_indices = @transform_2, window_bounds = array<i64: 1, 1, 512>}, {transform_indices = @transform_3, window_bounds = array<i64: 1, 256, 128>}, {pipeline_mode = #tpu.pipeline_mode<synchronous>, transform_indices = @transform_4, window_bounds = array<i64: 1, 128>}, {transform_indices = @transform_5, window_bounds = array<i64: 128, 128>}]} {
    %c0_i32 = arith.constant 0 : i32
    %0 = arith.cmpi eq, %arg1, %c0_i32 : i32
    %1 = arith.extui %0 : i1 to i32
    %c0_i32_0 = arith.constant 0 : i32
    %2 = arith.cmpi ne, %1, %c0_i32_0 : i32
    scf.if %2 {
      %cst_18 = arith.constant 0.000000e+00 : f32
      %29 = vector.broadcast %cst_18 : f32 to vector<128x128xf32>
      %c0_19 = arith.constant 0 : index
      %c0_20 = arith.constant 0 : index
      %30 = vector.load %arg8[%c0_19, %c0_20] : memref<128x128xf32, #tpu.memory_space<vmem>>, vector<128x128xf32>
      tpu.vector_store %arg8[%c0_19, %c0_20], %29 {strides = array<i32>} : memref<128x128xf32, #tpu.memory_space<vmem>>, vector<128x128xf32>,
    } else {
    }
    %c0 = arith.constant 0 : index
    %c0_1 = arith.constant 0 : index
    %3 = vector.load %arg2[%c0, %c0_1] : memref<128x256xf32, #tpu.memory_space<vmem>>, vector<128x256xf32>
    %c0_2 = arith.constant 0 : index
    %c0_3 = arith.constant 0 : index
    %c0_4 = arith.constant 0 : index
    %4 = vector.load %arg3[%c0_2, %c0_3, %c0_4] : memref<1x256x512xf32, #tpu.memory_space<vmem>>, vector<1x256x512xf32>
    %5 = vector.shape_cast %4 : vector<1x256x512xf32> to vector<256x512xf32>
    %cst = arith.constant dense<0.000000e+00> : vector<128x512xf32>
    %6 = tpu.matmul %3, %5, %cst {dimension_numbers = #tpu.dot_dimension_numbers<[1], [0], [0], [1], [0, 0, 1, 1], [], []>} : vector<128x256xf32>, vector<256x512xf32>, vector<128x512xf32> -> vector<128x512xf32>
    %c0_5 = arith.constant 0 : index
    %c0_6 = arith.constant 0 : index
    %c0_7 = arith.constant 0 : index
    %7 = vector.load %arg4[%c0_5, %c0_6, %c0_7] : memref<1x1x512xf32, #tpu.memory_space<vmem>>, vector<1x1x512xf32>
    %8 = vector.shape_cast %7 : vector<1x1x512xf32> to vector<1x512xf32>
    %9 = vector.broadcast %8 : vector<1x512xf32> to vector<128x512xf32>
    %10 = arith.addf %6, %9 : vector<128x512xf32>
    %11 = vector.extract_strided_slice %10 {offsets = [0, 0], sizes = [128, 256], strides = [1, 1]} : vector<128x512xf32> to vector<128x256xf32>
    %12 = vector.extract_strided_slice %10 {offsets = [0, 256], sizes = [128, 256], strides = [1, 1]} : vector<128x512xf32> to vector<128x256xf32>
    %13 = arith.negf %12 : vector<128x256xf32>
    %14 = math.exp %13 : vector<128x256xf32>
    %cst_8 = arith.constant 1.000000e+00 : f32
    %15 = vector.broadcast %cst_8 : f32 to vector<128x256xf32>
    %16 = arith.addf %15, %14 : vector<128x256xf32>
    %17 = arith.divf %15, %16 : vector<128x256xf32>
    %18 = arith.mulf %12, %17 : vector<128x256xf32>
    %19 = arith.mulf %11, %18 : vector<128x256xf32>
    %c0_9 = arith.constant 0 : index
    %c0_10 = arith.constant 0 : index
    %20 = vector.load %arg8[%c0_9, %c0_10] : memref<128x128xf32, #tpu.memory_space<vmem>>, vector<128x128xf32>
    %c0_11 = arith.constant 0 : index
    %c0_12 = arith.constant 0 : index
    %c0_13 = arith.constant 0 : index
    %21 = vector.load %arg5[%c0_11, %c0_12, %c0_13] : memref<1x256x128xf32, #tpu.memory_space<vmem>>, vector<1x256x128xf32>
    %22 = vector.shape_cast %21 : vector<1x256x128xf32> to vector<256x128xf32>
    %cst_14 = arith.constant dense<0.000000e+00> : vector<128x128xf32>
    %23 = tpu.matmul %19, %22, %cst_14 {dimension_numbers = #tpu.dot_dimension_numbers<[1], [0], [0], [1], [0, 0, 1, 1], [], []>} : vector<128x256xf32>, vector<256x128xf32>, vector<128x128xf32> -> vector<128x128xf32>
    %24 = arith.addf %20, %23 : vector<128x128xf32>
    %c0_15 = arith.constant 0 : index
    %c0_16 = arith.constant 0 : index
    %25 = vector.load %arg8[%c0_15, %c0_16] : memref<128x128xf32, #tpu.memory_space<vmem>>, vector<128x128xf32>
    tpu.vector_store %arg8[%c0_15, %c0_16], %24 {strides = array<i32>} : memref<128x128xf32, #tpu.memory_space<vmem>>, vector<128x128xf32>,
    %c1_i32 = arith.constant 1 : i32
    %26 = arith.cmpi eq, %arg1, %c1_i32 : i32
    %27 = arith.extui %26 : i1 to i32
    %c0_i32_17 = arith.constant 0 : i32
    %28 = arith.cmpi ne, %27, %c0_i32_17 : i32
    scf.if %28 {
      %c0_18 = arith.constant 0 : index
      %c0_19 = arith.constant 0 : index
      %29 = vector.load %arg8[%c0_18, %c0_19] : memref<128x128xf32, #tpu.memory_space<vmem>>, vector<128x128xf32>
      %c0_20 = arith.constant 0 : index
      %c0_21 = arith.constant 0 : index
      %30 = vector.load %arg6[%c0_20, %c0_21] : memref<1x128xf32, #tpu.memory_space<vmem>>, vector<1x128xf32>
      %31 = vector.broadcast %30 : vector<1x128xf32> to vector<128x128xf32>
      %32 = arith.addf %29, %31 : vector<128x128xf32>
      %c0_22 = arith.constant 0 : index
      %c0_23 = arith.constant 0 : index
      %33 = vector.load %arg7[%c0_22, %c0_23] : memref<128x128xf32, #tpu.memory_space<vmem>>, vector<128x128xf32>
      tpu.vector_store %arg7[%c0_22, %c0_23], %32 {strides = array<i32>} : memref<128x128xf32, #tpu.memory_space<vmem>>, vector<128x128xf32>,
    } else {
    }
    return
  }
  func.func @transform_0(%arg0: i32, %arg1: i32) -> (i32, i32) {
    %c0_i32 = arith.constant 0 : i32
    %c0_i32_0 = arith.constant 0 : i32
    return %arg0, %c0_i32 : i32, i32
  }
  func.func @transform_1(%arg0: i32, %arg1: i32) -> (i32, i32, i32) {
    %c0_i32 = arith.constant 0 : i32
    %c0_i32_0 = arith.constant 0 : i32
    %c0_i32_1 = arith.constant 0 : i32
    return %arg1, %c0_i32, %c0_i32_0 : i32, i32, i32
  }
  func.func @transform_2(%arg0: i32, %arg1: i32) -> (i32, i32, i32) {
    %c0_i32 = arith.constant 0 : i32
    %c0_i32_0 = arith.constant 0 : i32
    %c0_i32_1 = arith.constant 0 : i32
    return %arg1, %c0_i32, %c0_i32_0 : i32, i32, i32
  }
  func.func @transform_3(%arg0: i32, %arg1: i32) -> (i32, i32, i32) {
    %c0_i32 = arith.constant 0 : i32
    %c0_i32_0 = arith.constant 0 : i32
    %c0_i32_1 = arith.constant 0 : i32
    return %arg1, %c0_i32, %c0_i32_0 : i32, i32, i32
  }
  func.func @transform_4(%arg0: i32, %arg1: i32) -> (i32, i32) {
    %c0_i32 = arith.constant 0 : i32
    %c0_i32_0 = arith.constant 0 : i32
    %c0_i32_1 = arith.constant 0 : i32
    return %c0_i32, %c0_i32_0 : i32, i32
  }
  func.func @transform_5(%arg0: i32, %arg1: i32) -> (i32, i32) {
    %c0_i32 = arith.constant 0 : i32
    %c0_i32_0 = arith.constant 0 : i32
    return %arg0, %c0_i32 : i32, i32
  }
}

</mosaic_0001>

<llo_original>
// kernel: tpu_custom_call.1
$region0: #{tpu_custom_call.1}
  #allocation0 [shape = 'u32[]', space=smem, size = 0x4, offset = 0x4, fixed_abs, tag = 'smem constant byte address 0x4 - core index']
  #allocation1 [shape = 'u32[144,128]{1,0:T(1,128)}', space=vmem, size = 0x12000, scoped, tag = 'internal scratch']
  #allocation2 [shape = 'f32[128,128]{1,0:T(8,128)}', space=vmem, size = 0x10000, scoped, tag = 'scratch operand']
  %s0 = inlined_call_operand.hbm [shape: f32[512,256], index: 0, kind: input, shape index: {}]
  %s1 = inlined_call_operand.hbm [shape: f32[2,256,512], index: 1, kind: input, shape index: {}]
  %s2 = inlined_call_operand.hbm [shape: f32[2,1,512], index: 2, kind: input, shape index: {}]
  %s3 = inlined_call_operand.hbm [shape: f32[2,256,128], index: 3, kind: input, shape index: {}]
  %s4 = inlined_call_operand.vmem [shape: f32[1,128], index: 4, kind: input, shape index: {}]
  %s5 = inlined_call_operand.hbm [shape: f32[512,128], index: 5, kind: output, shape index: {}]
  %s6 = sld [smem:[#allocation0]]
  $region77: #{tpu_custom_call.1} parent=0
    _
  %s8 = ssub.s32 1, %s6
  %s9 = scalar_select 0, %s8, %s6
  $region1: #{tpu_custom_call.1} parent=0
    #allocation3 [shape = 'u8[262144]{0}', space=vmem, size = 0x40000, scoped, tag = 'input window, operand 0']
    #allocation4 [shape = 's32[2]{0}', space=sflag, size = 0x8, scoped, tag = 'scoped memory for tpu_custom_call.1']
    #allocation5 [shape = 's32[2]{0}', space=sflag, size = 0x8, scoped, tag = 'scoped memory for tpu_custom_call.1']
    #allocation6 [shape = 'u8[1048576]{0}', space=vmem, size = 0x100000, scoped, tag = 'input window, operand 1']
    #allocation7 [shape = 's32[2]{0}', space=sflag, size = 0x8, scoped, tag = 'scoped memory for tpu_custom_call.1']
    #allocation8 [shape = 'u8[4096]{0}', space=vmem, size = 0x1000, scoped, tag = 'input window, operand 2']
    #allocation9 [shape = 'u8[262144]{0}', space=vmem, size = 0x40000, scoped, tag = 'input window, operand 3']
    #allocation10 [shape = 's32[2]{0}', space=sflag, size = 0x8, scoped, tag = 'scoped memory for tpu_custom_call.1']
    #allocation11 [shape = 'u8[131072]{0}', space=vmem, size = 0x20000, scoped, tag = 'output window, operand 0']
    %10 = vsyncpa [#allocation4], 0
    %s11 = scalar_lea.sflag [#allocation4], 1
    %12 = vsyncpa %s11, 0
    %13 = vsyncpa [#allocation7], 0
    %s14 = scalar_lea.sflag [#allocation7], 1
    %15 = vsyncpa %s14, 0
    %16 = vsyncpa [#allocation10], 0
    %s17 = scalar_lea.sflag [#allocation10], 1
    %18 = vsyncpa %s17, 0
    %19 = vsyncpa [#allocation5], 0
    %s20 = scalar_lea.sflag [#allocation5], 1
    %21 = vsyncpa %s20, 0
    loop: start=0, step=1, limit=10
    $region2: #{tpu_custom_call.1} parent=1 // loop_pre_header
      _
    $region3: #{tpu_custom_call.1} parent=1 // loop_header
      %s23 = sphi 0, %s27
      %p24 = scmp.ge.s32.totalorder %s23, 10
      %s30 = sphi 0, %s42
      %s31 = sphi 0, %s38
      %s32 = sphi 0, %s30
      %s33 = sphi 0, %s31
      %s34 = sphi 0, %s32
      %s35 = sphi 0, %s33
      %s45 = sphi 0, %s47
      %s48 = sphi 0, %s45
      %s49 = sphi 0, %s48
      %s65 = sphi 0, %s49
      %s71 = sphi 0, %s73
      %s74 = sphi 0, %s71
      %s75 = sphi 0, %s74
      %s91 = sphi 0, %s75
      %s97 = sphi 0, %s99
      %s100 = sphi 0, %s97
      %s101 = sphi 0, %s100
      %s117 = sphi 0, %s101
      %s123 = sphi 0, %s125
      %s126 = sphi 0, %s123
      %s127 = sphi 0, %s126
      %s143 = sphi 0, %s127
      %s147 = sphi 0, %s147
      %s149 = sphi 0, %s147
      %s150 = sphi 0, %s149
      %s164 = sphi 0, %s150
      %s170 = sphi 0, %s172
      %s173 = sphi 0, %s170
      %s174 = sphi 0, %s173
      %s190 = sphi 0, %s174
    $region4: #{tpu_custom_call.1} parent=1 // loop_header_branch
      %26 = sbr.rel (%p24) target = $region8
    $region5: #{tpu_custom_call.1} parent=1 // loop_body
      %s28 = ssub.s32 %s23, 1
      %s29 = ssub.s32 %s23, 2
      %s36 = sadd.s32 1, %s31
      %p37 = scmp.ge.s32.totalorder %s36, 2
      %s38 = scalar_select %p37, 0, %s36
      %s39 = sadd.s32 1, %s30
      %s40 = scalar_select %p37, %s39, %s30
      %p41 = scmp.ge.s32.totalorder %s40, 4
      %s42 = scalar_select %p41, 0, %s40
      %s43 = ssub.s32 %s30, %s42
      %p44 = scmp.eq.s32.totalorder %s43, 0
      %s46 = sadd.s32 %s45, 1
      %s47 = scalar_select %p44, %s45, %s46
      %p50 = pneg %p44
      %p51 = scmp.eq.s32.totalorder %s23, 7
      %p52 = por %p50, %p51
      %p53 = scmp.ne.s32.totalorder %s45, %s48
      %p54 = scmp.eq.s32.totalorder %s23, 0
      %p55 = por %p53, %p54
      %p56 = scmp.ne.s32.totalorder %s45, %s48
      %p57 = scmp.eq.s32.totalorder %s28, 7
      %p58 = por %p56, %p57
      %p59 = scmp.ne.s32.totalorder %s48, %s49
      %p60 = scmp.eq.s32.totalorder %s28, 0
      %p61 = por %p59, %p60
      %p62 = scmp.ne.s32.totalorder %s48, %s49
      %p63 = scmp.eq.s32.totalorder %s29, 7
      %p64 = por %p62, %p63
      %p66 = scmp.ne.s32.totalorder %s49, %s65
      %p67 = scmp.eq.s32.totalorder %s29, 0
      %p68 = por %p66, %p67
      %s69 = ssub.s32 %s31, %s38
      %p70 = scmp.eq.s32.totalorder %s69, 0
      %s72 = sadd.s32 %s71, 1
      %s73 = scalar_select %p70, %s71, %s72
      %p76 = pneg %p70
      %p77 = scmp.eq.s32.totalorder %s23, 7
      %p78 = por %p76, %p77
      %p79 = scmp.ne.s32.totalorder %s71, %s74
      %p80 = scmp.eq.s32.totalorder %s23, 0
      %p81 = por %p79, %p80
      %p82 = scmp.ne.s32.totalorder %s71, %s74
      %p83 = scmp.eq.s32.totalorder %s28, 7
      %p84 = por %p82, %p83
      %p85 = scmp.ne.s32.totalorder %s74, %s75
      %p86 = scmp.eq.s32.totalorder %s28, 0
      %p87 = por %p85, %p86
      %p88 = scmp.ne.s32.totalorder %s74, %s75
      %p89 = scmp.eq.s32.totalorder %s29, 7
      %p90 = por %p88, %p89
      %p92 = scmp.ne.s32.totalorder %s75, %s91
      %p93 = scmp.eq.s32.totalorder %s29, 0
      %p94 = por %p92, %p93
      %s95 = ssub.s32 %s31, %s38
      %p96 = scmp.eq.s32.totalorder %s95, 0
      %s98 = sadd.s32 %s97, 1
      %s99 = scalar_select %p96, %s97, %s98
      %p102 = pneg %p96
      %p103 = scmp.eq.s32.totalorder %s23, 7
      %p104 = por %p102, %p103
      %p105 = scmp.ne.s32.totalorder %s97, %s100
      %p106 = scmp.eq.s32.totalorder %s23, 0
      %p107 = por %p105, %p106
      %p108 = scmp.ne.s32.totalorder %s97, %s100
      %p109 = scmp.eq.s32.totalorder %s28, 7
      %p110 = por %p108, %p109
      %p111 = scmp.ne.s32.totalorder %s100, %s101
      %p112 = scmp.eq.s32.totalorder %s28, 0
      %p113 = por %p111, %p112
      %p114 = scmp.ne.s32.totalorder %s100, %s101
      %p115 = scmp.eq.s32.totalorder %s29, 7
      %p116 = por %p114, %p115
      %p118 = scmp.ne.s32.totalorder %s101, %s117
      %p119 = scmp.eq.s32.totalorder %s29, 0
      %p120 = por %p118, %p119
      %s121 = ssub.s32 %s31, %s38
      %p122 = scmp.eq.s32.totalorder %s121, 0
      %s124 = sadd.s32 %s123, 1
      %s125 = scalar_select %p122, %s123, %s124
      %p128 = pneg %p122
      %p129 = scmp.eq.s32.totalorder %s23, 7
      %p130 = por %p128, %p129
      %p131 = scmp.ne.s32.totalorder %s123, %s126
      %p132 = scmp.eq.s32.totalorder %s23, 0
      %p133 = por %p131, %p132
      %p134 = scmp.ne.s32.totalorder %s123, %s126
      %p135 = scmp.eq.s32.totalorder %s28, 7
      %p136 = por %p134, %p135
      %p137 = scmp.ne.s32.totalorder %s126, %s127
      %p138 = scmp.eq.s32.totalorder %s28, 0
      %p139 = por %p137, %p138
      %p140 = scmp.ne.s32.totalorder %s126, %s127
      %p141 = scmp.eq.s32.totalorder %s29, 7
      %p142 = por %p140, %p141
      %p144 = scmp.ne.s32.totalorder %s127, %s143
      %p145 = scmp.eq.s32.totalorder %s29, 0
      %p146 = por %p144, %p145
      %s148 = sadd.s32 %s147, 1
      %p151 = scmp.eq.s32.totalorder %s23, 7
      %p152 = scmp.ne.s32.totalorder %s147, %s149
      %p153 = scmp.eq.s32.totalorder %s23, 0
      %p154 = por %p152, %p153
      %p155 = scmp.ne.s32.totalorder %s147, %s149
      %p156 = scmp.eq.s32.totalorder %s28, 7
      %p157 = por %p155, %p156
      %p158 = scmp.ne.s32.totalorder %s149, %s150
      %p159 = scmp.eq.s32.totalorder %s28, 0
      %p160 = por %p158, %p159
      %p161 = scmp.ne.s32.totalorder %s149, %s150
      %p162 = scmp.eq.s32.totalorder %s29, 7
      %p163 = por %p161, %p162
      %p165 = scmp.ne.s32.totalorder %s150, %s164
      %p166 = scmp.eq.s32.totalorder %s29, 0
      %p167 = por %p165, %p166
      %s168 = ssub.s32 %s30, %s42
      %p169 = scmp.eq.s32.totalorder %s168, 0
      %s171 = sadd.s32 %s170, 1
      %s172 = scalar_select %p169, %s170, %s171
      %p175 = pneg %p169
      %p176 = scmp.eq.s32.totalorder %s23, 7
      %p177 = por %p175, %p176
      %p178 = scmp.ne.s32.totalorder %s170, %s173
      %p179 = scmp.eq.s32.totalorder %s23, 0
      %p180 = por %p178, %p179
      %p181 = scmp.ne.s32.totalorder %s170, %s173
      %p182 = scmp.eq.s32.totalorder %s28, 7
      %p183 = por %p181, %p182
      %p184 = scmp.ne.s32.totalorder %s173, %s174
      %p185 = scmp.eq.s32.totalorder %s28, 0
      %p186 = por %p184, %p185
      %p187 = scmp.ne.s32.totalorder %s173, %s174
      %p188 = scmp.eq.s32.totalorder %s29, 7
      %p189 = por %p187, %p188
      %p191 = scmp.ne.s32.totalorder %s174, %s190
      %p192 = scmp.eq.s32.totalorder %s29, 0
      %p193 = por %p191, %p192
      %p194 = scmp.le.s32.totalorder 1, %s23
      %p195 = scmp.lt.s32.totalorder %s23, 9
      %p196 = pnand %p194, %p195
      %p197 = pneg %p196
      // Predicated region
      $region9: #{tpu_custom_call.1} parent=5 // pred_check
        _
      $region10: #{tpu_custom_call.1} parent=5 // pred_check_branch
        %199 = sbr.rel (%p196) target = $region12
      $region11: #{tpu_custom_call.1} parent=5 // pred_region
        %s200 = ssub.s32 %s23, 1
        // Predicated region
        $region13: #{tpu_custom_call.1} parent=11 // pred_check
          %p201 = pneg %p160
        $region14: #{tpu_custom_call.1} parent=11 // pred_check_branch
          %203 = sbr.rel (%p201) target = $region16
        $region15: #{tpu_custom_call.1} parent=11 // pred_region
          _
        $region16: #{tpu_custom_call.1} parent=11 // pred_fallthru
          _
      $region12: #{tpu_custom_call.1} parent=5 // pred_fallthru
        _
      %p204 = scmp.lt.s32.totalorder %s23, 8
      // Predicated region
      $region17: #{tpu_custom_call.1} parent=5 // pred_check
        %p205 = pneg %p204
      $region18: #{tpu_custom_call.1} parent=5 // pred_check_branch
        %207 = sbr.rel (%p205) target = $region20
      $region19: #{tpu_custom_call.1} parent=5 // pred_region
        // Predicated region
        $region21: #{tpu_custom_call.1} parent=19 // pred_check
          %p208 = pneg %p55
        $region22: #{tpu_custom_call.1} parent=19 // pred_check_branch
          %210 = sbr.rel (%p208) target = $region24
        $region23: #{tpu_custom_call.1} parent=19 // pred_region
          %s211 = sand.u32 %s45, 1
          %s212 = scalar_lea.sflag [#allocation4], %s211
          %s213 = sand.u32 %s45, 1
          %s214 = smul.addr %s213, 256
          %s215 = scalar_lea.vmem [#allocation3], %s214
          %s216 = smul.u32 16, %s30
          %s218 = ssub.s32 4096, 4096
          %219 = vsyncadd %s212, %s218
          %s220 = smul.addr %s216, 2
          %s221 = smul.addr %s220, 128
          %s222 = scalar_lea.hbm %s0, %s221
          %s223 = sshll.u32 %s215, 4
          %s224 = int_to_ptr.vmem [resolvable:$true] %s223
          %229 = dma.hbm_to_vmem [thread:$0]  %s222, 4096, %s224, %s212, 256, 256, 16
        $region24: #{tpu_custom_call.1} parent=19 // pred_fallthru
          _
        // Predicated region
        $region25: #{tpu_custom_call.1} parent=19 // pred_check
          %p230 = pneg %p81
        $region26: #{tpu_custom_call.1} parent=19 // pred_check_branch
          %232 = sbr.rel (%p230) target = $region28
        $region27: #{tpu_custom_call.1} parent=19 // pred_region
          %s233 = sand.u32 %s23, 1
          %s234 = scalar_lea.sflag [#allocation7], %s233
          %s235 = sand.u32 %s71, 1
          %s236 = smul.addr %s235, 1024
          %s237 = scalar_lea.vmem [#allocation6], %s236
          %s239 = ssub.s32 16384, 16384
          %240 = vsyncadd %s234, %s239
          %s241 = smul.addr %s31, 128
          %s242 = smul.addr %s241, 128
          %s243 = scalar_lea.hbm %s1, %s242
          %s244 = sshll.u32 %s237, 4
          %s245 = int_to_ptr.vmem [resolvable:$true] %s244
          %250 = dma.hbm_to_vmem [thread:$0]  %s243, 16384, %s245, %s234, 512, 512, 32
        $region28: #{tpu_custom_call.1} parent=19 // pred_fallthru
          _
        // Predicated region
        $region29: #{tpu_custom_call.1} parent=19 // pred_check
          %p251 = pneg %p107
        $region30: #{tpu_custom_call.1} parent=19 // pred_check_branch
          %253 = sbr.rel (%p251) target = $region32
        $region31: #{tpu_custom_call.1} parent=19 // pred_region
          %s254 = sand.u32 %s23, 1
          %s255 = scalar_lea.sflag [#allocation7], %s254
          %s256 = sand.u32 %s97, 1
          %s257 = smul.addr %s256, 4
          %s258 = scalar_lea.vmem [#allocation8], %s257
          %s260 = ssub.s32 64, 64
          %261 = vsyncadd %s255, %s260
          %s262 = smul.addr %s31, 4
          %s263 = smul.addr %s262, 16
          %s264 = scalar_lea.hbm %s2, %s263
          %s266 = sshll.u32 %s258, 4
          %s267 = int_to_ptr.vmem [resolvable:$true] %s266
          %269 = dma.hbm_to_vmem [thread:$0]  %s264, 64, %s267, %s255
        $region32: #{tpu_custom_call.1} parent=19 // pred_fallthru
          _
        // Predicated region
        $region33: #{tpu_custom_call.1} parent=19 // pred_check
          %p270 = pneg %p133
        $region34: #{tpu_custom_call.1} parent=19 // pred_check_branch
          %272 = sbr.rel (%p270) target = $region36
        $region35: #{tpu_custom_call.1} parent=19 // pred_region
          %s273 = sand.u32 %s123, 1
          %s274 = scalar_lea.sflag [#allocation10], %s273
          %s275 = sand.u32 %s123, 1
          %s276 = smul.addr %s275, 256
          %s277 = scalar_lea.vmem [#allocation9], %s276
          %s279 = ssub.s32 4096, 4096
          %280 = vsyncadd %s274, %s279
          %s281 = smul.addr %s31, 32
          %s282 = smul.addr %s281, 128
          %s283 = scalar_lea.hbm %s3, %s282
          %s284 = sshll.u32 %s277, 4
          %s285 = int_to_ptr.vmem [resolvable:$true] %s284
          %290 = dma.hbm_to_vmem [thread:$0]  %s283, 4096, %s285, %s274, 128, 128, 8
        $region36: #{tpu_custom_call.1} parent=19 // pred_fallthru
          _
      $region20: #{tpu_custom_call.1} parent=5 // pred_fallthru
        _
      %p291 = scmp.le.s32.totalorder 1, %s23
      %p292 = scmp.lt.s32.totalorder %s23, 9
      %p293 = pnand %p291, %p292
      %p294 = pneg %p293
      // Predicated region
      $region37: #{tpu_custom_call.1} parent=5 // pred_check
        _
      $region38: #{tpu_custom_call.1} parent=5 // pred_check_branch
        %296 = sbr.rel (%p293) target = $region40
      $region39: #{tpu_custom_call.1} parent=5 // pred_region
        %s297 = ssub.s32 %s23, 1
        %s298 = sand.u32 %s48, 1
        %s299 = scalar_lea.sflag [#allocation4], %s298
        %s300 = sand.u32 %s48, 1
        %s301 = smul.addr %s300, 256
        %s302 = scalar_lea.vmem [#allocation3], %s301
        // Predicated region
        $region41: #{tpu_custom_call.1} parent=39 // pred_check
          %p303 = pneg %p61
        $region42: #{tpu_custom_call.1} parent=39 // pred_check_branch
          %305 = sbr.rel (%p303) target = $region44
        $region43: #{tpu_custom_call.1} parent=39 // pred_region
          %306 = dma.done %s299, 4096
        $region44: #{tpu_custom_call.1} parent=39 // pred_fallthru
          _
        %s307 = sand.u32 %s28, 1
        %s308 = scalar_lea.sflag [#allocation7], %s307
        %s309 = sand.u32 %s74, 1
        %s310 = smul.addr %s309, 1024
        %s311 = scalar_lea.vmem [#allocation6], %s310
        // Predicated region
        $region45: #{tpu_custom_call.1} parent=39 // pred_check
          %p312 = pneg %p87
        $region46: #{tpu_custom_call.1} parent=39 // pred_check_branch
          %314 = sbr.rel (%p312) target = $region48
        $region47: #{tpu_custom_call.1} parent=39 // pred_region
          %315 = dma.done %s308, 16384
        $region48: #{tpu_custom_call.1} parent=39 // pred_fallthru
          _
        %s316 = sand.u32 %s28, 1
        %s317 = scalar_lea.sflag [#allocation7], %s316
        %s318 = sand.u32 %s100, 1
        %s319 = smul.addr %s318, 4
        %s320 = scalar_lea.vmem [#allocation8], %s319
        // Predicated region
        $region49: #{tpu_custom_call.1} parent=39 // pred_check
          %p321 = pneg %p113
        $region50: #{tpu_custom_call.1} parent=39 // pred_check_branch
          %323 = sbr.rel (%p321) target = $region52
        $region51: #{tpu_custom_call.1} parent=39 // pred_region
          %324 = dma.done %s317, 64
        $region52: #{tpu_custom_call.1} parent=39 // pred_fallthru
          _
        %s325 = sand.u32 %s126, 1
        %s326 = scalar_lea.sflag [#allocation10], %s325
        %s327 = sand.u32 %s126, 1
        %s328 = smul.addr %s327, 256
        %s329 = scalar_lea.vmem [#allocation9], %s328
        // Predicated region
        $region53: #{tpu_custom_call.1} parent=39 // pred_check
          %p330 = pneg %p139
        $region54: #{tpu_custom_call.1} parent=39 // pred_check_branch
          %332 = sbr.rel (%p330) target = $region56
        $region55: #{tpu_custom_call.1} parent=39 // pred_region
          %333 = dma.done %s326, 4096
        $region56: #{tpu_custom_call.1} parent=39 // pred_fallthru
          _
        %s334 = sand.u32 %s48, 1
        %s335 = scalar_lea.sflag [#allocation4], %s334
        %s336 = sand.u32 %s48, 1
        %s337 = smul.addr %s336, 256
        %s338 = scalar_lea.vmem [#allocation3], %s337
        %p339 = pneg %p61
        %p340 = pneg %p58
        %s341 = sand.u32 %s28, 1
        %s342 = scalar_lea.sflag [#allocation7], %s341
        %s343 = sand.u32 %s74, 1
        %s344 = smul.addr %s343, 1024
        %s345 = scalar_lea.vmem [#allocation6], %s344
        %p346 = pneg %p87
        %p347 = pneg %p84
        %s348 = sand.u32 %s28, 1
        %s349 = scalar_lea.sflag [#allocation7], %s348
        %s350 = sand.u32 %s100, 1
        %s351 = smul.addr %s350, 4
        %s352 = scalar_lea.vmem [#allocation8], %s351
        %p353 = pneg %p113
        %p354 = pneg %p110
        %s355 = sand.u32 %s126, 1
        %s356 = scalar_lea.sflag [#allocation10], %s355
        %s357 = sand.u32 %s126, 1
        %s358 = smul.addr %s357, 256
        %s359 = scalar_lea.vmem [#allocation9], %s358
        %p360 = pneg %p139
        %p361 = pneg %p136
        %p362 = pneg %p160
        %p363 = pneg %p157
        %p364 = pneg %p186
        %p365 = pneg %p183
        %s366 = sand.u32 %s173, 1
        %s367 = scalar_lea.sflag [#allocation5], %s366
        %s368 = sand.u32 %s173, 1
        %s369 = smul.addr %s368, 128
        %s370 = scalar_lea.vmem [#allocation11], %s369
        %s371 = smul.u32 16, %s32
        %s372 = smul.u32 16, %s32
        %p373 = scmp.eq.s32.totalorder %s33, 0
        // Predicated region
        $region57: #{tpu_custom_call.1} parent=39 // pred_check
          %p374 = pneg %p373
        $region58: #{tpu_custom_call.1} parent=39 // pred_check_branch
          %376 = sbr.rel (%p374) target = $region60
        $region59: #{tpu_custom_call.1} parent=39 // pred_region
          %377 = vst [vmem:[#allocation2] sm:$0xff] 0.0
          %378 = vst [vmem:[#allocation2 + $0x8] sm:$0xff] 0.0
          %379 = vst [vmem:[#allocation2 + $0x10] sm:$0xff] 0.0
          %380 = vst [vmem:[#allocation2 + $0x18] sm:$0xff] 0.0
          %381 = vst [vmem:[#allocation2 + $0x20] sm:$0xff] 0.0
          %382 = vst [vmem:[#allocation2 + $0x28] sm:$0xff] 0.0
          %383 = vst [vmem:[#allocation2 + $0x30] sm:$0xff] 0.0
          %384 = vst [vmem:[#allocation2 + $0x38] sm:$0xff] 0.0
          %385 = vst [vmem:[#allocation2 + $0x40] sm:$0xff] 0.0
          %386 = vst [vmem:[#allocation2 + $0x48] sm:$0xff] 0.0
          %387 = vst [vmem:[#allocation2 + $0x50] sm:$0xff] 0.0
          %388 = vst [vmem:[#allocation2 + $0x58] sm:$0xff] 0.0
          %389 = vst [vmem:[#allocation2 + $0x60] sm:$0xff] 0.0
          %390 = vst [vmem:[#allocation2 + $0x68] sm:$0xff] 0.0
          %391 = vst [vmem:[#allocation2 + $0x70] sm:$0xff] 0.0
          %392 = vst [vmem:[#allocation2 + $0x78] sm:$0xff] 0.0
        $region60: #{tpu_custom_call.1} parent=39 // pred_fallthru
          _
        %v393 = vld [vmem:[%s302] sm:$0xff]
        %v394 = vld [vmem:[%s302 + $0x8] sm:$0xff]
        %v395 = vld [vmem:[%s302 + $0x10] sm:$0xff]
        %v396 = vld [vmem:[%s302 + $0x18] sm:$0xff]
        %v397 = vld [vmem:[%s302 + $0x20] sm:$0xff]
        %v398 = vld [vmem:[%s302 + $0x28] sm:$0xff]
        %v399 = vld [vmem:[%s302 + $0x30] sm:$0xff]
        %v400 = vld [vmem:[%s302 + $0x38] sm:$0xff]
        %v401 = vld [vmem:[%s302 + $0x40] sm:$0xff]
        %v402 = vld [vmem:[%s302 + $0x48] sm:$0xff]
        %v403 = vld [vmem:[%s302 + $0x50] sm:$0xff]
        %v404 = vld [vmem:[%s302 + $0x58] sm:$0xff]
        %v405 = vld [vmem:[%s302 + $0x60] sm:$0xff]
        %v406 = vld [vmem:[%s302 + $0x68] sm:$0xff]
        %v407 = vld [vmem:[%s302 + $0x70] sm:$0xff]
        %v408 = vld [vmem:[%s302 + $0x78] sm:$0xff]
        %v409 = vld [vmem:[%s302 + $0x80] sm:$0xff]
        %v410 = vld [vmem:[%s302 + $0x88] sm:$0xff]
        %v411 = vld [vmem:[%s302 + $0x90] sm:$0xff]
        %v412 = vld [vmem:[%s302 + $0x98] sm:$0xff]
        %v413 = vld [vmem:[%s302 + $0xa0] sm:$0xff]
        %v414 = vld [vmem:[%s302 + $0xa8] sm:$0xff]
        %v415 = vld [vmem:[%s302 + $0xb0] sm:$0xff]
        %v416 = vld [vmem:[%s302 + $0xb8] sm:$0xff]
        %v417 = vld [vmem:[%s302 + $0xc0] sm:$0xff]
        %v418 = vld [vmem:[%s302 + $0xc8] sm:$0xff]
        %v419 = vld [vmem:[%s302 + $0xd0] sm:$0xff]
        %v420 = vld [vmem:[%s302 + $0xd8] sm:$0xff]
        %v421 = vld [vmem:[%s302 + $0xe0] sm:$0xff]
        %v422 = vld [vmem:[%s302 + $0xe8] sm:$0xff]
        %v423 = vld [vmem:[%s302 + $0xf0] sm:$0xff]
        %v424 = vld [vmem:[%s302 + $0xf8] sm:$0xff]
        %v425 = vld [vmem:[%s311] sm:$0xff]
        %v426 = vld [vmem:[%s311 + $0x8] sm:$0xff]
        %v427 = vld [vmem:[%s311 + $0x10] sm:$0xff]
        %v428 = vld [vmem:[%s311 + $0x18] sm:$0xff]
        %v429 = vld [vmem:[%s311 + $0x20] sm:$0xff]
        %v430 = vld [vmem:[%s311 + $0x28] sm:$0xff]
        %v431 = vld [vmem:[%s311 + $0x30] sm:$0xff]
        %v432 = vld [vmem:[%s311 + $0x38] sm:$0xff]
        %v433 = vld [vmem:[%s311 + $0x40] sm:$0xff]
        %v434 = vld [vmem:[%s311 + $0x48] sm:$0xff]
        %v435 = vld [vmem:[%s311 + $0x50] sm:$0xff]
        %v436 = vld [vmem:[%s311 + $0x58] sm:$0xff]
        %v437 = vld [vmem:[%s311 + $0x60] sm:$0xff]
        %v438 = vld [vmem:[%s311 + $0x68] sm:$0xff]
        %v439 = vld [vmem:[%s311 + $0x70] sm:$0xff]
        %v440 = vld [vmem:[%s311 + $0x78] sm:$0xff]
        %v441 = vld [vmem:[%s311 + $0x80] sm:$0xff]
        %v442 = vld [vmem:[%s311 + $0x88] sm:$0xff]
        %v443 = vld [vmem:[%s311 + $0x90] sm:$0xff]
        %v444 = vld [vmem:[%s311 + $0x98] sm:$0xff]
        %v445 = vld [vmem:[%s311 + $0xa0] sm:$0xff]
        %v446 = vld [vmem:[%s311 + $0xa8] sm:$0xff]
        %v447 = vld [vmem:[%s311 + $0xb0] sm:$0xff]
        %v448 = vld [vmem:[%s311 + $0xb8] sm:$0xff]
        %v449 = vld [vmem:[%s311 + $0xc0] sm:$0xff]
        %v450 = vld [vmem:[%s311 + $0xc8] sm:$0xff]
        %v451 = vld [vmem:[%s311 + $0xd0] sm:$0xff]
        %v452 = vld [vmem:[%s311 + $0xd8] sm:$0xff]
        %v453 = vld [vmem:[%s311 + $0xe0] sm:$0xff]
        %v454 = vld [vmem:[%s311 + $0xe8] sm:$0xff]
        %v455 = vld [vmem:[%s311 + $0xf0] sm:$0xff]
        %v456 = vld [vmem:[%s311 + $0xf8] sm:$0xff]
        %v457 = vld [vmem:[%s311 + $0x100] sm:$0xff]
        %v458 = vld [vmem:[%s311 + $0x108] sm:$0xff]
        %v459 = vld [vmem:[%s311 + $0x110] sm:$0xff]
        %v460 = vld [vmem:[%s311 + $0x118] sm:$0xff]
        %v461 = vld [vmem:[%s311 + $0x120] sm:$0xff]
        %v462 = vld [vmem:[%s311 + $0x128] sm:$0xff]
        %v463 = vld [vmem:[%s311 + $0x130] sm:$0xff]
        %v464 = vld [vmem:[%s311 + $0x138] sm:$0xff]
        %v465 = vld [vmem:[%s311 + $0x140] sm:$0xff]
        %v466 = vld [vmem:[%s311 + $0x148] sm:$0xff]
        %v467 = vld [vmem:[%s311 + $0x150] sm:$0xff]
        %v468 = vld [vmem:[%s311 + $0x158] sm:$0xff]
        %v469 = vld [vmem:[%s311 + $0x160] sm:$0xff]
        %v470 = vld [vmem:[%s311 + $0x168] sm:$0xff]
        %v471 = vld [vmem:[%s311 + $0x170] sm:$0xff]
        %v472 = vld [vmem:[%s311 + $0x178] sm:$0xff]
        %v473 = vld [vmem:[%s311 + $0x180] sm:$0xff]
        %v474 = vld [vmem:[%s311 + $0x188] sm:$0xff]
        %v475 = vld [vmem:[%s311 + $0x190] sm:$0xff]
        %v476 = vld [vmem:[%s311 + $0x198] sm:$0xff]
        %v477 = vld [vmem:[%s311 + $0x1a0] sm:$0xff]
        %v478 = vld [vmem:[%s311 + $0x1a8] sm:$0xff]
        %v479 = vld [vmem:[%s311 + $0x1b0] sm:$0xff]
        %v480 = vld [vmem:[%s311 + $0x1b8] sm:$0xff]
        %v481 = vld [vmem:[%s311 + $0x1c0] sm:$0xff]
        %v482 = vld [vmem:[%s311 + $0x1c8] sm:$0xff]
        %v483 = vld [vmem:[%s311 + $0x1d0] sm:$0xff]
        %v484 = vld [vmem:[%s311 + $0x1d8] sm:$0xff]
        %v485 = vld [vmem:[%s311 + $0x1e0] sm:$0xff]
        %v486 = vld [vmem:[%s311 + $0x1e8] sm:$0xff]
        %v487 = vld [vmem:[%s311 + $0x1f0] sm:$0xff]
        %v488 = vld [vmem:[%s311 + $0x1f8] sm:$0xff]
        %v489 = vld [vmem:[%s311 + $0x200] sm:$0xff]
        %v490 = vld [vmem:[%s311 + $0x208] sm:$0xff]
        %v491 = vld [vmem:[%s311 + $0x210] sm:$0xff]
        %v492 = vld [vmem:[%s311 + $0x218] sm:$0xff]
        %v493 = vld [vmem:[%s311 + $0x220] sm:$0xff]
        %v494 = vld [vmem:[%s311 + $0x228] sm:$0xff]
        %v495 = vld [vmem:[%s311 + $0x230] sm:$0xff]
        %v496 = vld [vmem:[%s311 + $0x238] sm:$0xff]
        %v497 = vld [vmem:[%s311 + $0x240] sm:$0xff]
        %v498 = vld [vmem:[%s311 + $0x248] sm:$0xff]
        %v499 = vld [vmem:[%s311 + $0x250] sm:$0xff]
        %v500 = vld [vmem:[%s311 + $0x258] sm:$0xff]
        %v501 = vld [vmem:[%s311 + $0x260] sm:$0xff]
        %v502 = vld [vmem:[%s311 + $0x268] sm:$0xff]
        %v503 = vld [vmem:[%s311 + $0x270] sm:$0xff]
        %v504 = vld [vmem:[%s311 + $0x278] sm:$0xff]
        %v505 = vld [vmem:[%s311 + $0x280] sm:$0xff]
        %v506 = vld [vmem:[%s311 + $0x288] sm:$0xff]
        %v507 = vld [vmem:[%s311 + $0x290] sm:$0xff]
        %v508 = vld [vmem:[%s311 + $0x298] sm:$0xff]
        %v509 = vld [vmem:[%s311 + $0x2a0] sm:$0xff]
        %v510 = vld [vmem:[%s311 + $0x2a8] sm:$0xff]
        %v511 = vld [vmem:[%s311 + $0x2b0] sm:$0xff]
        %v512 = vld [vmem:[%s311 + $0x2b8] sm:$0xff]
        %v513 = vld [vmem:[%s311 + $0x2c0] sm:$0xff]
        %v514 = vld [vmem:[%s311 + $0x2c8] sm:$0xff]
        %v515 = vld [vmem:[%s311 + $0x2d0] sm:$0xff]
        %v516 = vld [vmem:[%s311 + $0x2d8] sm:$0xff]
        %v517 = vld [vmem:[%s311 + $0x2e0] sm:$0xff]
        %v518 = vld [vmem:[%s311 + $0x2e8] sm:$0xff]
        %v519 = vld [vmem:[%s311 + $0x2f0] sm:$0xff]
        %v520 = vld [vmem:[%s311 + $0x2f8] sm:$0xff]
        %v521 = vld [vmem:[%s311 + $0x300] sm:$0xff]
        %v522 = vld [vmem:[%s311 + $0x308] sm:$0xff]
        %v523 = vld [vmem:[%s311 + $0x310] sm:$0xff]
        %v524 = vld [vmem:[%s311 + $0x318] sm:$0xff]
        %v525 = vld [vmem:[%s311 + $0x320] sm:$0xff]
        %v526 = vld [vmem:[%s311 + $0x328] sm:$0xff]
        %v527 = vld [vmem:[%s311 + $0x330] sm:$0xff]
        %v528 = vld [vmem:[%s311 + $0x338] sm:$0xff]
        %v529 = vld [vmem:[%s311 + $0x340] sm:$0xff]
        %v530 = vld [vmem:[%s311 + $0x348] sm:$0xff]
        %v531 = vld [vmem:[%s311 + $0x350] sm:$0xff]
        %v532 = vld [vmem:[%s311 + $0x358] sm:$0xff]
        %v533 = vld [vmem:[%s311 + $0x360] sm:$0xff]
        %v534 = vld [vmem:[%s311 + $0x368] sm:$0xff]
        %v535 = vld [vmem:[%s311 + $0x370] sm:$0xff]
        %v536 = vld [vmem:[%s311 + $0x378] sm:$0xff]
        %v537 = vld [vmem:[%s311 + $0x380] sm:$0xff]
        %v538 = vld [vmem:[%s311 + $0x388] sm:$0xff]
        %v539 = vld [vmem:[%s311 + $0x390] sm:$0xff]
        %v540 = vld [vmem:[%s311 + $0x398] sm:$0xff]
        %v541 = vld [vmem:[%s311 + $0x3a0] sm:$0xff]
        %v542 = vld [vmem:[%s311 + $0x3a8] sm:$0xff]
        %v543 = vld [vmem:[%s311 + $0x3b0] sm:$0xff]
        %v544 = vld [vmem:[%s311 + $0x3b8] sm:$0xff]
        %v545 = vld [vmem:[%s311 + $0x3c0] sm:$0xff]
        %v546 = vld [vmem:[%s311 + $0x3c8] sm:$0xff]
        %v547 = vld [vmem:[%s311 + $0x3d0] sm:$0xff]
        %v548 = vld [vmem:[%s311 + $0x3d8] sm:$0xff]
        %v549 = vld [vmem:[%s311 + $0x3e0] sm:$0xff]
        %v550 = vld [vmem:[%s311 + $0x3e8] sm:$0xff]
        %v551 = vld [vmem:[%s311 + $0x3f0] sm:$0xff]
        %v552 = vld [vmem:[%s311 + $0x3f8] sm:$0xff]
        %v553 = vld [vmem:[%s320] sm:$0xf]
        %v555 = vlaneseq
        %v556 = vshrl.u32 %v555, 7
        %v557 = vsub.s32 0, %v556
        %v558 = vrot.slane %v553, %v557
        %v559 = vlaneseq
        %v560 = vshrl.u32 %v559, 7
        %v561 = vsub.s32 1, %v560
        %v562 = vrot.slane %v553, %v561
        %v563 = vlaneseq
        %v564 = vshrl.u32 %v563, 7
        %v565 = vsub.s32 2, %v564
        %v566 = vrot.slane %v553, %v565
        %v567 = vlaneseq
        %v568 = vshrl.u32 %v567, 7
        %v569 = vsub.s32 3, %v568
        %v570 = vrot.slane %v553, %v569
        %575 = vmatprep.subr.mxu0 %v486
        %576 = vmatpush1.msra.mxu0 %v485
        %577 = vmatprep.subr.mxu0 %v482
        %578 = vmatpush1.msra.mxu0 %v481
        %579 = vmatprep.subr.mxu0 %v478
        %580 = vmatpush1.msra.mxu0 %v477
        %581 = vmatprep.subr.mxu0 %v474
        %582 = vmatpush1.msra.mxu0 %v473
        %583 = vmatprep.subr.mxu0 %v470
        %584 = vmatpush1.msra.mxu0 %v469
        %585 = vmatprep.subr.mxu0 %v466
        %586 = vmatpush1.msra.mxu0 %v465
        %587 = vmatprep.subr.mxu0 %v462
        %588 = vmatpush1.msra.mxu0 %v461
        %589 = vmatprep.subr.mxu0 %v458
        %590 = vmatpush1.msra.mxu0 %v457
        %591 = vmatprep.subr.mxu0 %v454
        %592 = vmatpush1.msra.mxu0 %v453
        %593 = vmatprep.subr.mxu0 %v450
        %594 = vmatpush1.msra.mxu0 %v449
        %595 = vmatprep.subr.mxu0 %v446
        %596 = vmatpush1.msra.mxu0 %v445
        %597 = vmatprep.subr.mxu0 %v442
        %598 = vmatpush1.msra.mxu0 %v441
        %599 = vmatprep.subr.mxu0 %v438
        %600 = vmatpush1.msra.mxu0 %v437
        %601 = vmatprep.subr.mxu0 %v434
        %602 = vmatpush1.msra.mxu0 %v433
        %603 = vmatprep.subr.mxu0 %v430
        %604 = vmatpush1.msra.mxu0 %v429
        %605 = vmatprep.subr.mxu0 %v426
        %606 = vmatpush1.msra.mxu0 %v425
        %607 = vmatprep.subr.mxu0 %v550
        %608 = vmatpush2.msra.mxu0 %v549
        %609 = vmatprep.subr.mxu0 %v546
        %610 = vmatpush2.msra.mxu0 %v545
        %611 = vmatprep.subr.mxu0 %v542
        %612 = vmatpush2.msra.mxu0 %v541
        %613 = vmatprep.subr.mxu0 %v538
        %614 = vmatpush2.msra.mxu0 %v537
        %615 = vmatprep.subr.mxu0 %v534
        %616 = vmatpush2.msra.mxu0 %v533
        %617 = vmatprep.subr.mxu0 %v530
        %618 = vmatpush2.msra.mxu0 %v529
        %619 = vmatprep.subr.mxu0 %v526
        %620 = vmatpush2.msra.mxu0 %v525
        %621 = vmatprep.subr.mxu0 %v522
        %622 = vmatpush2.msra.mxu0 %v521
        %623 = vmatprep.subr.mxu0 %v518
        %624 = vmatpush2.msra.mxu0 %v517
        %625 = vmatprep.subr.mxu0 %v514
        %626 = vmatpush2.msra.mxu0 %v513
        %627 = vmatprep.subr.mxu0 %v510
        %628 = vmatpush2.msra.mxu0 %v509
        %629 = vmatprep.subr.mxu0 %v506
        %630 = vmatpush2.msra.mxu0 %v505
        %631 = vmatprep.subr.mxu0 %v502
        %632 = vmatpush2.msra.mxu0 %v501
        %633 = vmatprep.subr.mxu0 %v498
        %634 = vmatpush2.msra.mxu0 %v497
        %635 = vmatprep.subr.mxu0 %v494
        %636 = vmatpush2.msra.mxu0 %v493
        %637 = vmatprep.subr.mxu0 %v490
        %638 = vmatpush2.msra.mxu0 %v489
        %639 = vmatprep.mubr.f32.mxu0 %v394
        %640 = vmatmul.mubr.f32.gmra.mxu0 %v393
        %v641 = vpop.f32.mrf.mxu0
        %v642 = vadd.f32 %v558, %v641
        %v643 = vpop.f32.mrf.mxu0
        %v644 = vadd.f32 %v562, %v643
        %645 = vmatprep.mubr.f32.mxu0 %v396
        %646 = vmatmul.mubr.f32.gmra.mxu0 %v395
        %v647 = vpop.f32.mrf.mxu0
        %v648 = vadd.f32 %v558, %v647
        %v649 = vpop.f32.mrf.mxu0
        %v650 = vadd.f32 %v562, %v649
        %651 = vmatprep.mubr.f32.mxu0 %v398
        %652 = vmatmul.mubr.f32.gmra.mxu0 %v397
        %v653 = vpop.f32.mrf.mxu0
        %v654 = vadd.f32 %v558, %v653
        %v655 = vpop.f32.mrf.mxu0
        %v656 = vadd.f32 %v562, %v655
        %657 = vmatprep.mubr.f32.mxu0 %v400
        %658 = vmatmul.mubr.f32.gmra.mxu0 %v399
        %v659 = vpop.f32.mrf.mxu0
        %v660 = vadd.f32 %v558, %v659
        %v661 = vpop.f32.mrf.mxu0
        %v662 = vadd.f32 %v562, %v661
        %663 = vmatprep.mubr.f32.mxu0 %v402
        %664 = vmatmul.mubr.f32.gmra.mxu0 %v401
        %v665 = vpop.f32.mrf.mxu0
        %v666 = vadd.f32 %v558, %v665
        %v667 = vpop.f32.mrf.mxu0
        %v668 = vadd.f32 %v562, %v667
        %669 = vmatprep.mubr.f32.mxu0 %v404
        %670 = vmatmul.mubr.f32.gmra.mxu0 %v403
        %v671 = vpop.f32.mrf.mxu0
        %v672 = vadd.f32 %v558, %v671
        %v673 = vpop.f32.mrf.mxu0
        %v674 = vadd.f32 %v562, %v673
        %675 = vmatprep.mubr.f32.mxu0 %v406
        %676 = vmatmul.mubr.f32.gmra.mxu0 %v405
        %v677 = vpop.f32.mrf.mxu0
        %v678 = vadd.f32 %v558, %v677
        %v679 = vpop.f32.mrf.mxu0
        %v680 = vadd.f32 %v562, %v679
        %681 = vmatprep.mubr.f32.mxu0 %v408
        %682 = vmatmul.mubr.f32.gmra.mxu0 %v407
        %v683 = vpop.f32.mrf.mxu0
        %v684 = vadd.f32 %v558, %v683
        %v685 = vpop.f32.mrf.mxu0
        %v686 = vadd.f32 %v562, %v685
        %687 = vmatprep.mubr.f32.mxu0 %v410
        %688 = vmatmul.mubr.f32.gmra.mxu0 %v409
        %v689 = vpop.f32.mrf.mxu0
        %v690 = vadd.f32 %v558, %v689
        %v691 = vpop.f32.mrf.mxu0
        %v692 = vadd.f32 %v562, %v691
        %693 = vmatprep.mubr.f32.mxu0 %v412
        %694 = vmatmul.mubr.f32.gmra.mxu0 %v411
        %v695 = vpop.f32.mrf.mxu0
        %v696 = vadd.f32 %v558, %v695
        %v697 = vpop.f32.mrf.mxu0
        %v698 = vadd.f32 %v562, %v697
        %699 = vmatprep.mubr.f32.mxu0 %v414
        %700 = vmatmul.mubr.f32.gmra.mxu0 %v413
        %v701 = vpop.f32.mrf.mxu0
        %v702 = vadd.f32 %v558, %v701
        %v703 = vpop.f32.mrf.mxu0
        %v704 = vadd.f32 %v562, %v703
        %705 = vmatprep.mubr.f32.mxu0 %v416
        %706 = vmatmul.mubr.f32.gmra.mxu0 %v415
        %v707 = vpop.f32.mrf.mxu0
        %v708 = vadd.f32 %v558, %v707
        %v709 = vpop.f32.mrf.mxu0
        %v710 = vadd.f32 %v562, %v709
        %711 = vmatprep.mubr.f32.mxu0 %v418
        %712 = vmatmul.mubr.f32.gmra.mxu0 %v417
        %v713 = vpop.f32.mrf.mxu0
        %v714 = vadd.f32 %v558, %v713
        %v715 = vpop.f32.mrf.mxu0
        %v716 = vadd.f32 %v562, %v715
        %717 = vmatprep.mubr.f32.mxu0 %v420
        %718 = vmatmul.mubr.f32.gmra.mxu0 %v419
        %v719 = vpop.f32.mrf.mxu0
        %v720 = vadd.f32 %v558, %v719
        %v721 = vpop.f32.mrf.mxu0
        %v722 = vadd.f32 %v562, %v721
        %723 = vmatprep.mubr.f32.mxu0 %v422
        %724 = vmatmul.mubr.f32.gmra.mxu0 %v421
        %v725 = vpop.f32.mrf.mxu0
        %v726 = vadd.f32 %v558, %v725
        %v727 = vpop.f32.mrf.mxu0
        %v728 = vadd.f32 %v562, %v727
        %729 = vmatprep.mubr.f32.mxu0 %v424
        %730 = vmatmul.mubr.f32.gmra.mxu0 %v423
        %v731 = vpop.f32.mrf.mxu0
        %v732 = vadd.f32 %v558, %v731
        %v733 = vpop.f32.mrf.mxu0
        %v734 = vadd.f32 %v562, %v733
        %735 = vdwg.mxu0
        %736 = vmatprep.subr.mxu0 %v488
        %737 = vmatpush1.msra.mxu0 %v487
        %738 = vmatprep.subr.mxu0 %v484
        %739 = vmatpush1.msra.mxu0 %v483
        %740 = vmatprep.subr.mxu0 %v480
        %741 = vmatpush1.msra.mxu0 %v479
        %742 = vmatprep.subr.mxu0 %v476
        %743 = vmatpush1.msra.mxu0 %v475
        %744 = vmatprep.subr.mxu0 %v472
        %745 = vmatpush1.msra.mxu0 %v471
        %746 = vmatprep.subr.mxu0 %v468
        %747 = vmatpush1.msra.mxu0 %v467
        %748 = vmatprep.subr.mxu0 %v464
        %749 = vmatpush1.msra.mxu0 %v463
        %750 = vmatprep.subr.mxu0 %v460
        %751 = vmatpush1.msra.mxu0 %v459
        %752 = vmatprep.subr.mxu0 %v456
        %753 = vmatpush1.msra.mxu0 %v455
        %754 = vmatprep.subr.mxu0 %v452
        %755 = vmatpush1.msra.mxu0 %v451
        %756 = vmatprep.subr.mxu0 %v448
        %757 = vmatpush1.msra.mxu0 %v447
        %758 = vmatprep.subr.mxu0 %v444
        %759 = vmatpush1.msra.mxu0 %v443
        %760 = vmatprep.subr.mxu0 %v440
        %761 = vmatpush1.msra.mxu0 %v439
        %762 = vmatprep.subr.mxu0 %v436
        %763 = vmatpush1.msra.mxu0 %v435
        %764 = vmatprep.subr.mxu0 %v432
        %765 = vmatpush1.msra.mxu0 %v431
        %766 = vmatprep.subr.mxu0 %v428
        %767 = vmatpush1.msra.mxu0 %v427
        %768 = vmatprep.subr.mxu0 %v552
        %769 = vmatpush2.msra.mxu0 %v551
        %770 = vmatprep.subr.mxu0 %v548
        %771 = vmatpush2.msra.mxu0 %v547
        %772 = vmatprep.subr.mxu0 %v544
        %773 = vmatpush2.msra.mxu0 %v543
        %774 = vmatprep.subr.mxu0 %v540
        %775 = vmatpush2.msra.mxu0 %v539
        %776 = vmatprep.subr.mxu0 %v536
        %777 = vmatpush2.msra.mxu0 %v535
        %778 = vmatprep.subr.mxu0 %v532
        %779 = vmatpush2.msra.mxu0 %v531
        %780 = vmatprep.subr.mxu0 %v528
        %781 = vmatpush2.msra.mxu0 %v527
        %782 = vmatprep.subr.mxu0 %v524
        %783 = vmatpush2.msra.mxu0 %v523
        %784 = vmatprep.subr.mxu0 %v520
        %785 = vmatpush2.msra.mxu0 %v519
        %786 = vmatprep.subr.mxu0 %v516
        %787 = vmatpush2.msra.mxu0 %v515
        %788 = vmatprep.subr.mxu0 %v512
        %789 = vmatpush2.msra.mxu0 %v511
        %790 = vmatprep.subr.mxu0 %v508
        %791 = vmatpush2.msra.mxu0 %v507
        %792 = vmatprep.subr.mxu0 %v504
        %793 = vmatpush2.msra.mxu0 %v503
        %794 = vmatprep.subr.mxu0 %v500
        %795 = vmatpush2.msra.mxu0 %v499
        %796 = vmatprep.subr.mxu0 %v496
        %797 = vmatpush2.msra.mxu0 %v495
        %798 = vmatprep.subr.mxu0 %v492
        %799 = vmatpush2.msra.mxu0 %v491
        %800 = vmatprep.mubr.f32.mxu0 %v394
        %801 = vmatmul.mubr.f32.gmra.mxu0 %v393
        %v802 = vpop.f32.mrf.mxu0
        %v803 = vadd.f32 %v566, %v802
        %v804 = vpop.f32.mrf.mxu0
        %v805 = vadd.f32 %v570, %v804
        %806 = vmatprep.mubr.f32.mxu0 %v396
        %807 = vmatmul.mubr.f32.gmra.mxu0 %v395
        %v808 = vpop.f32.mrf.mxu0
        %v809 = vadd.f32 %v566, %v808
        %v810 = vpop.f32.mrf.mxu0
        %v811 = vadd.f32 %v570, %v810
        %812 = vmatprep.mubr.f32.mxu0 %v398
        %813 = vmatmul.mubr.f32.gmra.mxu0 %v397
        %v814 = vpop.f32.mrf.mxu0
        %v815 = vadd.f32 %v566, %v814
        %v816 = vpop.f32.mrf.mxu0
        %v817 = vadd.f32 %v570, %v816
        %818 = vmatprep.mubr.f32.mxu0 %v400
        %819 = vmatmul.mubr.f32.gmra.mxu0 %v399
        %v820 = vpop.f32.mrf.mxu0
        %v821 = vadd.f32 %v566, %v820
        %v822 = vpop.f32.mrf.mxu0
        %v823 = vadd.f32 %v570, %v822
        %824 = vmatprep.mubr.f32.mxu0 %v402
        %825 = vmatmul.mubr.f32.gmra.mxu0 %v401
        %v826 = vpop.f32.mrf.mxu0
        %v827 = vadd.f32 %v566, %v826
        %v828 = vpop.f32.mrf.mxu0
        %v829 = vadd.f32 %v570, %v828
        %830 = vmatprep.mubr.f32.mxu0 %v404
        %831 = vmatmul.mubr.f32.gmra.mxu0 %v403
        %v832 = vpop.f32.mrf.mxu0
        %v833 = vadd.f32 %v566, %v832
        %v834 = vpop.f32.mrf.mxu0
        %v835 = vadd.f32 %v570, %v834
        %836 = vmatprep.mubr.f32.mxu0 %v406
        %837 = vmatmul.mubr.f32.gmra.mxu0 %v405
        %v838 = vpop.f32.mrf.mxu0
        %v839 = vadd.f32 %v566, %v838
        %v840 = vpop.f32.mrf.mxu0
        %v841 = vadd.f32 %v570, %v840
        %842 = vmatprep.mubr.f32.mxu0 %v408
        %843 = vmatmul.mubr.f32.gmra.mxu0 %v407
        %v844 = vpop.f32.mrf.mxu0
        %v845 = vadd.f32 %v566, %v844
        %v846 = vpop.f32.mrf.mxu0
        %v847 = vadd.f32 %v570, %v846
        %848 = vmatprep.mubr.f32.mxu0 %v410
        %849 = vmatmul.mubr.f32.gmra.mxu0 %v409
        %v850 = vpop.f32.mrf.mxu0
        %v851 = vadd.f32 %v566, %v850
        %v852 = vpop.f32.mrf.mxu0
        %v853 = vadd.f32 %v570, %v852
        %854 = vmatprep.mubr.f32.mxu0 %v412
        %855 = vmatmul.mubr.f32.gmra.mxu0 %v411
        %v856 = vpop.f32.mrf.mxu0
        %v857 = vadd.f32 %v566, %v856
        %v858 = vpop.f32.mrf.mxu0
        %v859 = vadd.f32 %v570, %v858
        %860 = vmatprep.mubr.f32.mxu0 %v414
        %861 = vmatmul.mubr.f32.gmra.mxu0 %v413
        %v862 = vpop.f32.mrf.mxu0
        %v863 = vadd.f32 %v566, %v862
        %v864 = vpop.f32.mrf.mxu0
        %v865 = vadd.f32 %v570, %v864
        %866 = vmatprep.mubr.f32.mxu0 %v416
        %867 = vmatmul.mubr.f32.gmra.mxu0 %v415
        %v868 = vpop.f32.mrf.mxu0
        %v869 = vadd.f32 %v566, %v868
        %v870 = vpop.f32.mrf.mxu0
        %v871 = vadd.f32 %v570, %v870
        %872 = vmatprep.mubr.f32.mxu0 %v418
        %873 = vmatmul.mubr.f32.gmra.mxu0 %v417
        %v874 = vpop.f32.mrf.mxu0
        %v875 = vadd.f32 %v566, %v874
        %v876 = vpop.f32.mrf.mxu0
        %v877 = vadd.f32 %v570, %v876
        %878 = vmatprep.mubr.f32.mxu0 %v420
        %879 = vmatmul.mubr.f32.gmra.mxu0 %v419
        %v880 = vpop.f32.mrf.mxu0
        %v881 = vadd.f32 %v566, %v880
        %v882 = vpop.f32.mrf.mxu0
        %v883 = vadd.f32 %v570, %v882
        %884 = vmatprep.mubr.f32.mxu0 %v422
        %885 = vmatmul.mubr.f32.gmra.mxu0 %v421
        %v886 = vpop.f32.mrf.mxu0
        %v887 = vadd.f32 %v566, %v886
        %v888 = vpop.f32.mrf.mxu0
        %v889 = vadd.f32 %v570, %v888
        %890 = vmatprep.mubr.f32.mxu0 %v424
        %891 = vmatmul.mubr.f32.gmra.mxu0 %v423
        %v892 = vpop.f32.mrf.mxu0
        %v893 = vadd.f32 %v566, %v892
        %v894 = vpop.f32.mrf.mxu0
        %v895 = vadd.f32 %v570, %v894
        %896 = vdwg.mxu0
        %v897 = vxor.u32 %v803, 2147483648
        %v898 = vxor.u32 %v805, 2147483648
        %v899 = vxor.u32 %v809, 2147483648
        %v900 = vxor.u32 %v811, 2147483648
        %v901 = vxor.u32 %v815, 2147483648
        %v902 = vxor.u32 %v817, 2147483648
        %v903 = vxor.u32 %v821, 2147483648
        %v904 = vxor.u32 %v823, 2147483648
        %v905 = vxor.u32 %v827, 2147483648
        %v906 = vxor.u32 %v829, 2147483648
        %v907 = vxor.u32 %v833, 2147483648
        %v908 = vxor.u32 %v835, 2147483648
        %v909 = vxor.u32 %v839, 2147483648
        %v910 = vxor.u32 %v841, 2147483648
        %v911 = vxor.u32 %v845, 2147483648
        %v912 = vxor.u32 %v847, 2147483648
        %v913 = vxor.u32 %v851, 2147483648
        %v914 = vxor.u32 %v853, 2147483648
        %v915 = vxor.u32 %v857, 2147483648
        %v916 = vxor.u32 %v859, 2147483648
        %v917 = vxor.u32 %v863, 2147483648
        %v918 = vxor.u32 %v865, 2147483648
        %v919 = vxor.u32 %v869, 2147483648
        %v920 = vxor.u32 %v871, 2147483648
        %v921 = vxor.u32 %v875, 2147483648
        %v922 = vxor.u32 %v877, 2147483648
        %v923 = vxor.u32 %v881, 2147483648
        %v924 = vxor.u32 %v883, 2147483648
        %v925 = vxor.u32 %v887, 2147483648
        %v926 = vxor.u32 %v889, 2147483648
        %v927 = vxor.u32 %v893, 2147483648
        %v928 = vxor.u32 %v895, 2147483648
        %v929 = vmul.f32 %v897, 1.442695
        %v930 = vpow.pop %v929
        %v931 = vmul.f32 %v898, 1.442695
        %v932 = vpow.pop %v931
        %v933 = vmul.f32 %v899, 1.442695
        %v934 = vpow.pop %v933
        %v935 = vmul.f32 %v900, 1.442695
        %v936 = vpow.pop %v935
        %v937 = vmul.f32 %v901, 1.442695
        %v938 = vpow.pop %v937
        %v939 = vmul.f32 %v902, 1.442695
        %v940 = vpow.pop %v939
        %v941 = vmul.f32 %v903, 1.442695
        %v942 = vpow.pop %v941
        %v943 = vmul.f32 %v904, 1.442695
        %v944 = vpow.pop %v943
        %v945 = vmul.f32 %v905, 1.442695
        %v946 = vpow.pop %v945
        %v947 = vmul.f32 %v906, 1.442695
        %v948 = vpow.pop %v947
        %v949 = vmul.f32 %v907, 1.442695
        %v950 = vpow.pop %v949
        %v951 = vmul.f32 %v908, 1.442695
        %v952 = vpow.pop %v951
        %v953 = vmul.f32 %v909, 1.442695
        %v954 = vpow.pop %v953
        %v955 = vmul.f32 %v910, 1.442695
        %v956 = vpow.pop %v955
        %v957 = vmul.f32 %v911, 1.442695
        %v958 = vpow.pop %v957
        %v959 = vmul.f32 %v912, 1.442695
        %v960 = vpow.pop %v959
        %v961 = vmul.f32 %v913, 1.442695
        %v962 = vpow.pop %v961
        %v963 = vmul.f32 %v914, 1.442695
        %v964 = vpow.pop %v963
        %v965 = vmul.f32 %v915, 1.442695
        %v966 = vpow.pop %v965
        %v967 = vmul.f32 %v916, 1.442695
        %v968 = vpow.pop %v967
        %v969 = vmul.f32 %v917, 1.442695
        %v970 = vpow.pop %v969
        %v971 = vmul.f32 %v918, 1.442695
        %v972 = vpow.pop %v971
        %v973 = vmul.f32 %v919, 1.442695
        %v974 = vpow.pop %v973
        %v975 = vmul.f32 %v920, 1.442695
        %v976 = vpow.pop %v975
        %v977 = vmul.f32 %v921, 1.442695
        %v978 = vpow.pop %v977
        %v979 = vmul.f32 %v922, 1.442695
        %v980 = vpow.pop %v979
        %v981 = vmul.f32 %v923, 1.442695
        %v982 = vpow.pop %v981
        %v983 = vmul.f32 %v924, 1.442695
        %v984 = vpow.pop %v983
        %v985 = vmul.f32 %v925, 1.442695
        %v986 = vpow.pop %v985
        %v987 = vmul.f32 %v926, 1.442695
        %v988 = vpow.pop %v987
        %v989 = vmul.f32 %v927, 1.442695
        %v990 = vpow.pop %v989
        %v991 = vmul.f32 %v928, 1.442695
        %v992 = vpow.pop %v991
        %v993 = vadd.f32 %v930, 1.0
        %v994 = vadd.f32 %v932, 1.0
        %v995 = vadd.f32 %v934, 1.0
        %v996 = vadd.f32 %v936, 1.0
        %v997 = vadd.f32 %v938, 1.0
        %v998 = vadd.f32 %v940, 1.0
        %v999 = vadd.f32 %v942, 1.0
        %v1000 = vadd.f32 %v944, 1.0
        %v1001 = vadd.f32 %v946, 1.0
        %v1002 = vadd.f32 %v948, 1.0
        %v1003 = vadd.f32 %v950, 1.0
        %v1004 = vadd.f32 %v952, 1.0
        %v1005 = vadd.f32 %v954, 1.0
        %v1006 = vadd.f32 %v956, 1.0
        %v1007 = vadd.f32 %v958, 1.0
        %v1008 = vadd.f32 %v960, 1.0
        %v1009 = vadd.f32 %v962, 1.0
        %v1010 = vadd.f32 %v964, 1.0
        %v1011 = vadd.f32 %v966, 1.0
        %v1012 = vadd.f32 %v968, 1.0
        %v1013 = vadd.f32 %v970, 1.0
        %v1014 = vadd.f32 %v972, 1.0
        %v1015 = vadd.f32 %v974, 1.0
        %v1016 = vadd.f32 %v976, 1.0
        %v1017 = vadd.f32 %v978, 1.0
        %v1018 = vadd.f32 %v980, 1.0
        %v1019 = vadd.f32 %v982, 1.0
        %v1020 = vadd.f32 %v984, 1.0
        %v1021 = vadd.f32 %v986, 1.0
        %v1022 = vadd.f32 %v988, 1.0
        %v1023 = vadd.f32 %v990, 1.0
        %v1024 = vadd.f32 %v992, 1.0
        %v1025 = vrcp.pop %v993
        %v1026 = vmul.f32 1.0, %v1025
        %v1027 = vrcp.pop %v994
        %v1028 = vmul.f32 1.0, %v1027
        %v1029 = vrcp.pop %v995
        %v1030 = vmul.f32 1.0, %v1029
        %v1031 = vrcp.pop %v996
        %v1032 = vmul.f32 1.0, %v1031
        %v1033 = vrcp.pop %v997
        %v1034 = vmul.f32 1.0, %v1033
        %v1035 = vrcp.pop %v998
        %v1036 = vmul.f32 1.0, %v1035
        %v1037 = vrcp.pop %v999
        %v1038 = vmul.f32 1.0, %v1037
        %v1039 = vrcp.pop %v1000
        %v1040 = vmul.f32 1.0, %v1039
        %v1041 = vrcp.pop %v1001
        %v1042 = vmul.f32 1.0, %v1041
        %v1043 = vrcp.pop %v1002
        %v1044 = vmul.f32 1.0, %v1043
        %v1045 = vrcp.pop %v1003
        %v1046 = vmul.f32 1.0, %v1045
        %v1047 = vrcp.pop %v1004
        %v1048 = vmul.f32 1.0, %v1047
        %v1049 = vrcp.pop %v1005
        %v1050 = vmul.f32 1.0, %v1049
        %v1051 = vrcp.pop %v1006
        %v1052 = vmul.f32 1.0, %v1051
        %v1053 = vrcp.pop %v1007
        %v1054 = vmul.f32 1.0, %v1053
        %v1055 = vrcp.pop %v1008
        %v1056 = vmul.f32 1.0, %v1055
        %v1057 = vrcp.pop %v1009
        %v1058 = vmul.f32 1.0, %v1057
        %v1059 = vrcp.pop %v1010
        %v1060 = vmul.f32 1.0, %v1059
        %v1061 = vrcp.pop %v1011
        %v1062 = vmul.f32 1.0, %v1061
        %v1063 = vrcp.pop %v1012
        %v1064 = vmul.f32 1.0, %v1063
        %v1065 = vrcp.pop %v1013
        %v1066 = vmul.f32 1.0, %v1065
        %v1067 = vrcp.pop %v1014
        %v1068 = vmul.f32 1.0, %v1067
        %v1069 = vrcp.pop %v1015
        %v1070 = vmul.f32 1.0, %v1069
        %v1071 = vrcp.pop %v1016
        %v1072 = vmul.f32 1.0, %v1071
        %v1073 = vrcp.pop %v1017
        %v1074 = vmul.f32 1.0, %v1073
        %v1075 = vrcp.pop %v1018
        %v1076 = vmul.f32 1.0, %v1075
        %v1077 = vrcp.pop %v1019
        %v1078 = vmul.f32 1.0, %v1077
        %v1079 = vrcp.pop %v1020
        %v1080 = vmul.f32 1.0, %v1079
        %v1081 = vrcp.pop %v1021
        %v1082 = vmul.f32 1.0, %v1081
        %v1083 = vrcp.pop %v1022
        %v1084 = vmul.f32 1.0, %v1083
        %v1085 = vrcp.pop %v1023
        %v1086 = vmul.f32 1.0, %v1085
        %v1087 = vrcp.pop %v1024
        %v1088 = vmul.f32 1.0, %v1087
        %v1089 = vmul.f32 %v803, %v1026
        %v1090 = vmul.f32 %v805, %v1028
        %v1091 = vmul.f32 %v809, %v1030
        %v1092 = vmul.f32 %v811, %v1032
        %v1093 = vmul.f32 %v815, %v1034
        %v1094 = vmul.f32 %v817, %v1036
        %v1095 = vmul.f32 %v821, %v1038
        %v1096 = vmul.f32 %v823, %v1040
        %v1097 = vmul.f32 %v827, %v1042
        %v1098 = vmul.f32 %v829, %v1044
        %v1099 = vmul.f32 %v833, %v1046
        %v1100 = vmul.f32 %v835, %v1048
        %v1101 = vmul.f32 %v839, %v1050
        %v1102 = vmul.f32 %v841, %v1052
        %v1103 = vmul.f32 %v845, %v1054
        %v1104 = vmul.f32 %v847, %v1056
        %v1105 = vmul.f32 %v851, %v1058
        %v1106 = vmul.f32 %v853, %v1060
        %v1107 = vmul.f32 %v857, %v1062
        %v1108 = vmul.f32 %v859, %v1064
        %v1109 = vmul.f32 %v863, %v1066
        %v1110 = vmul.f32 %v865, %v1068
        %v1111 = vmul.f32 %v869, %v1070
        %v1112 = vmul.f32 %v871, %v1072
        %v1113 = vmul.f32 %v875, %v1074
        %v1114 = vmul.f32 %v877, %v1076
        %v1115 = vmul.f32 %v881, %v1078
        %v1116 = vmul.f32 %v883, %v1080
        %v1117 = vmul.f32 %v887, %v1082
        %v1118 = vmul.f32 %v889, %v1084
        %v1119 = vmul.f32 %v893, %v1086
        %v1120 = vmul.f32 %v895, %v1088
        %v1121 = vmul.f32 %v642, %v1089
        %v1122 = vmul.f32 %v644, %v1090
        %v1123 = vmul.f32 %v648, %v1091
        %v1124 = vmul.f32 %v650, %v1092
        %v1125 = vmul.f32 %v654, %v1093
        %v1126 = vmul.f32 %v656, %v1094
        %v1127 = vmul.f32 %v660, %v1095
        %v1128 = vmul.f32 %v662, %v1096
        %v1129 = vmul.f32 %v666, %v1097
        %v1130 = vmul.f32 %v668, %v1098
        %v1131 = vmul.f32 %v672, %v1099
        %v1132 = vmul.f32 %v674, %v1100
        %v1133 = vmul.f32 %v678, %v1101
        %v1134 = vmul.f32 %v680, %v1102
        %v1135 = vmul.f32 %v684, %v1103
        %v1136 = vmul.f32 %v686, %v1104
        %v1137 = vmul.f32 %v690, %v1105
        %v1138 = vmul.f32 %v692, %v1106
        %v1139 = vmul.f32 %v696, %v1107
        %v1140 = vmul.f32 %v698, %v1108
        %v1141 = vmul.f32 %v702, %v1109
        %v1142 = vmul.f32 %v704, %v1110
        %v1143 = vmul.f32 %v708, %v1111
        %v1144 = vmul.f32 %v710, %v1112
        %v1145 = vmul.f32 %v714, %v1113
        %v1146 = vmul.f32 %v716, %v1114
        %v1147 = vmul.f32 %v720, %v1115
        %v1148 = vmul.f32 %v722, %v1116
        %v1149 = vmul.f32 %v726, %v1117
        %v1150 = vmul.f32 %v728, %v1118
        %v1151 = vmul.f32 %v732, %v1119
        %v1152 = vmul.f32 %v734, %v1120
        %v1153 = vld [vmem:[#allocation2] sm:$0xff]
        %v1154 = vld [vmem:[#allocation2 + $0x8] sm:$0xff]
        %v1155 = vld [vmem:[#allocation2 + $0x10] sm:$0xff]
        %v1156 = vld [vmem:[#allocation2 + $0x18] sm:$0xff]
        %v1157 = vld [vmem:[#allocation2 + $0x20] sm:$0xff]
        %v1158 = vld [vmem:[#allocation2 + $0x28] sm:$0xff]
        %v1159 = vld [vmem:[#allocation2 + $0x30] sm:$0xff]
        %v1160 = vld [vmem:[#allocation2 + $0x38] sm:$0xff]
        %v1161 = vld [vmem:[#allocation2 + $0x40] sm:$0xff]
        %v1162 = vld [vmem:[#allocation2 + $0x48] sm:$0xff]
        %v1163 = vld [vmem:[#allocation2 + $0x50] sm:$0xff]
        %v1164 = vld [vmem:[#allocation2 + $0x58] sm:$0xff]
        %v1165 = vld [vmem:[#allocation2 + $0x60] sm:$0xff]
        %v1166 = vld [vmem:[#allocation2 + $0x68] sm:$0xff]
        %v1167 = vld [vmem:[#allocation2 + $0x70] sm:$0xff]
        %v1168 = vld [vmem:[#allocation2 + $0x78] sm:$0xff]
        %v1169 = vld [vmem:[%s329] sm:$0xff]
        %v1170 = vld [vmem:[%s329 + $0x8] sm:$0xff]
        %v1171 = vld [vmem:[%s329 + $0x10] sm:$0xff]
        %v1172 = vld [vmem:[%s329 + $0x18] sm:$0xff]
        %v1173 = vld [vmem:[%s329 + $0x20] sm:$0xff]
        %v1174 = vld [vmem:[%s329 + $0x28] sm:$0xff]
        %v1175 = vld [vmem:[%s329 + $0x30] sm:$0xff]
        %v1176 = vld [vmem:[%s329 + $0x38] sm:$0xff]
        %v1177 = vld [vmem:[%s329 + $0x40] sm:$0xff]
        %v1178 = vld [vmem:[%s329 + $0x48] sm:$0xff]
        %v1179 = vld [vmem:[%s329 + $0x50] sm:$0xff]
        %v1180 = vld [vmem:[%s329 + $0x58] sm:$0xff]
        %v1181 = vld [vmem:[%s329 + $0x60] sm:$0xff]
        %v1182 = vld [vmem:[%s329 + $0x68] sm:$0xff]
        %v1183 = vld [vmem:[%s329 + $0x70] sm:$0xff]
        %v1184 = vld [vmem:[%s329 + $0x78] sm:$0xff]
        %v1185 = vld [vmem:[%s329 + $0x80] sm:$0xff]
        %v1186 = vld [vmem:[%s329 + $0x88] sm:$0xff]
        %v1187 = vld [vmem:[%s329 + $0x90] sm:$0xff]
        %v1188 = vld [vmem:[%s329 + $0x98] sm:$0xff]
        %v1189 = vld [vmem:[%s329 + $0xa0] sm:$0xff]
        %v1190 = vld [vmem:[%s329 + $0xa8] sm:$0xff]
        %v1191 = vld [vmem:[%s329 + $0xb0] sm:$0xff]
        %v1192 = vld [vmem:[%s329 + $0xb8] sm:$0xff]
        %v1193 = vld [vmem:[%s329 + $0xc0] sm:$0xff]
        %v1194 = vld [vmem:[%s329 + $0xc8] sm:$0xff]
        %v1195 = vld [vmem:[%s329 + $0xd0] sm:$0xff]
        %v1196 = vld [vmem:[%s329 + $0xd8] sm:$0xff]
        %v1197 = vld [vmem:[%s329 + $0xe0] sm:$0xff]
        %v1198 = vld [vmem:[%s329 + $0xe8] sm:$0xff]
        %v1199 = vld [vmem:[%s329 + $0xf0] sm:$0xff]
        %v1200 = vld [vmem:[%s329 + $0xf8] sm:$0xff]
        %1201 = vmatprep.subr.mxu0 0.0
        %1202 = vmatpush1.msra.mxu0 %v1184
        %1203 = vmatprep.subr.mxu0 0.0
        %1204 = vmatpush1.msra.mxu0 %v1183
        %1205 = vmatprep.subr.mxu0 0.0
        %1206 = vmatpush1.msra.mxu0 %v1182
        %1207 = vmatprep.subr.mxu0 0.0
        %1208 = vmatpush1.msra.mxu0 %v1181
        %1209 = vmatprep.subr.mxu0 0.0
        %1210 = vmatpush1.msra.mxu0 %v1180
        %1211 = vmatprep.subr.mxu0 0.0
        %1212 = vmatpush1.msra.mxu0 %v1179
        %1213 = vmatprep.subr.mxu0 0.0
        %1214 = vmatpush1.msra.mxu0 %v1178
        %1215 = vmatprep.subr.mxu0 0.0
        %1216 = vmatpush1.msra.mxu0 %v1177
        %1217 = vmatprep.subr.mxu0 0.0
        %1218 = vmatpush1.msra.mxu0 %v1176
        %1219 = vmatprep.subr.mxu0 0.0
        %1220 = vmatpush1.msra.mxu0 %v1175
        %1221 = vmatprep.subr.mxu0 0.0
        %1222 = vmatpush1.msra.mxu0 %v1174
        %1223 = vmatprep.subr.mxu0 0.0
        %1224 = vmatpush1.msra.mxu0 %v1173
        %1225 = vmatprep.subr.mxu0 0.0
        %1226 = vmatpush1.msra.mxu0 %v1172
        %1227 = vmatprep.subr.mxu0 0.0
        %1228 = vmatpush1.msra.mxu0 %v1171
        %1229 = vmatprep.subr.mxu0 0.0
        %1230 = vmatpush1.msra.mxu0 %v1170
        %1231 = vmatprep.subr.mxu0 0.0
        %1232 = vmatpush1.msra.mxu0 %v1169
        %1233 = vmatprep.subr.mxu0 0.0
        %1234 = vmatpush2.msra.mxu0 %v1200
        %1235 = vmatprep.subr.mxu0 0.0
        %1236 = vmatpush2.msra.mxu0 %v1199
        %1237 = vmatprep.subr.mxu0 0.0
        %1238 = vmatpush2.msra.mxu0 %v1198
        %1239 = vmatprep.subr.mxu0 0.0
        %1240 = vmatpush2.msra.mxu0 %v1197
        %1241 = vmatprep.subr.mxu0 0.0
        %1242 = vmatpush2.msra.mxu0 %v1196
        %1243 = vmatprep.subr.mxu0 0.0
        %1244 = vmatpush2.msra.mxu0 %v1195
        %1245 = vmatprep.subr.mxu0 0.0
        %1246 = vmatpush2.msra.mxu0 %v1194
        %1247 = vmatprep.subr.mxu0 0.0
        %1248 = vmatpush2.msra.mxu0 %v1193
        %1249 = vmatprep.subr.mxu0 0.0
        %1250 = vmatpush2.msra.mxu0 %v1192
        %1251 = vmatprep.subr.mxu0 0.0
        %1252 = vmatpush2.msra.mxu0 %v1191
        %1253 = vmatprep.subr.mxu0 0.0
        %1254 = vmatpush2.msra.mxu0 %v1190
        %1255 = vmatprep.subr.mxu0 0.0
        %1256 = vmatpush2.msra.mxu0 %v1189
        %1257 = vmatprep.subr.mxu0 0.0
        %1258 = vmatpush2.msra.mxu0 %v1188
        %1259 = vmatprep.subr.mxu0 0.0
        %1260 = vmatpush2.msra.mxu0 %v1187
        %1261 = vmatprep.subr.mxu0 0.0
        %1262 = vmatpush2.msra.mxu0 %v1186
        %1263 = vmatprep.subr.mxu0 0.0
        %1264 = vmatpush2.msra.mxu0 %v1185
        %1265 = vmatprep.mubr.f32.mxu0 %v1122
        %1266 = vmatmul.mubr.f32.gmra.mxu0 %v1121
        %v1267 = vpop.f32.mrf.mxu0
        %v1268 = vadd.f32 0.0, %v1267
        %v1269 = vpop.f32.mrf.mxu0
        %1270 = vmatprep.mubr.f32.mxu0 %v1124
        %1271 = vmatmul.mubr.f32.gmra.mxu0 %v1123
        %v1272 = vpop.f32.mrf.mxu0
        %v1273 = vadd.f32 0.0, %v1272
        %v1274 = vpop.f32.mrf.mxu0
        %1275 = vmatprep.mubr.f32.mxu0 %v1126
        %1276 = vmatmul.mubr.f32.gmra.mxu0 %v1125
        %v1277 = vpop.f32.mrf.mxu0
        %v1278 = vadd.f32 0.0, %v1277
        %v1279 = vpop.f32.mrf.mxu0
        %1280 = vmatprep.mubr.f32.mxu0 %v1128
        %1281 = vmatmul.mubr.f32.gmra.mxu0 %v1127
        %v1282 = vpop.f32.mrf.mxu0
        %v1283 = vadd.f32 0.0, %v1282
        %v1284 = vpop.f32.mrf.mxu0
        %1285 = vmatprep.mubr.f32.mxu0 %v1130
        %1286 = vmatmul.mubr.f32.gmra.mxu0 %v1129
        %v1287 = vpop.f32.mrf.mxu0
        %v1288 = vadd.f32 0.0, %v1287
        %v1289 = vpop.f32.mrf.mxu0
        %1290 = vmatprep.mubr.f32.mxu0 %v1132
        %1291 = vmatmul.mubr.f32.gmra.mxu0 %v1131
        %v1292 = vpop.f32.mrf.mxu0
        %v1293 = vadd.f32 0.0, %v1292
        %v1294 = vpop.f32.mrf.mxu0
        %1295 = vmatprep.mubr.f32.mxu0 %v1134
        %1296 = vmatmul.mubr.f32.gmra.mxu0 %v1133
        %v1297 = vpop.f32.mrf.mxu0
        %v1298 = vadd.f32 0.0, %v1297
        %v1299 = vpop.f32.mrf.mxu0
        %1300 = vmatprep.mubr.f32.mxu0 %v1136
        %1301 = vmatmul.mubr.f32.gmra.mxu0 %v1135
        %v1302 = vpop.f32.mrf.mxu0
        %v1303 = vadd.f32 0.0, %v1302
        %v1304 = vpop.f32.mrf.mxu0
        %1305 = vmatprep.mubr.f32.mxu0 %v1138
        %1306 = vmatmul.mubr.f32.gmra.mxu0 %v1137
        %v1307 = vpop.f32.mrf.mxu0
        %v1308 = vadd.f32 0.0, %v1307
        %v1309 = vpop.f32.mrf.mxu0
        %1310 = vmatprep.mubr.f32.mxu0 %v1140
        %1311 = vmatmul.mubr.f32.gmra.mxu0 %v1139
        %v1312 = vpop.f32.mrf.mxu0
        %v1313 = vadd.f32 0.0, %v1312
        %v1314 = vpop.f32.mrf.mxu0
        %1315 = vmatprep.mubr.f32.mxu0 %v1142
        %1316 = vmatmul.mubr.f32.gmra.mxu0 %v1141
        %v1317 = vpop.f32.mrf.mxu0
        %v1318 = vadd.f32 0.0, %v1317
        %v1319 = vpop.f32.mrf.mxu0
        %1320 = vmatprep.mubr.f32.mxu0 %v1144
        %1321 = vmatmul.mubr.f32.gmra.mxu0 %v1143
        %v1322 = vpop.f32.mrf.mxu0
        %v1323 = vadd.f32 0.0, %v1322
        %v1324 = vpop.f32.mrf.mxu0
        %1325 = vmatprep.mubr.f32.mxu0 %v1146
        %1326 = vmatmul.mubr.f32.gmra.mxu0 %v1145
        %v1327 = vpop.f32.mrf.mxu0
        %v1328 = vadd.f32 0.0, %v1327
        %v1329 = vpop.f32.mrf.mxu0
        %1330 = vmatprep.mubr.f32.mxu0 %v1148
        %1331 = vmatmul.mubr.f32.gmra.mxu0 %v1147
        %v1332 = vpop.f32.mrf.mxu0
        %v1333 = vadd.f32 0.0, %v1332
        %v1334 = vpop.f32.mrf.mxu0
        %1335 = vmatprep.mubr.f32.mxu0 %v1150
        %1336 = vmatmul.mubr.f32.gmra.mxu0 %v1149
        %v1337 = vpop.f32.mrf.mxu0
        %v1338 = vadd.f32 0.0, %v1337
        %v1339 = vpop.f32.mrf.mxu0
        %1340 = vmatprep.mubr.f32.mxu0 %v1152
        %1341 = vmatmul.mubr.f32.gmra.mxu0 %v1151
        %v1342 = vpop.f32.mrf.mxu0
        %v1343 = vadd.f32 0.0, %v1342
        %v1344 = vpop.f32.mrf.mxu0
        %1345 = vdwg.mxu0
        %v1346 = vadd.f32 %v1153, %v1268
        %v1347 = vadd.f32 %v1154, %v1273
        %v1348 = vadd.f32 %v1155, %v1278
        %v1349 = vadd.f32 %v1156, %v1283
        %v1350 = vadd.f32 %v1157, %v1288
        %v1351 = vadd.f32 %v1158, %v1293
        %v1352 = vadd.f32 %v1159, %v1298
        %v1353 = vadd.f32 %v1160, %v1303
        %v1354 = vadd.f32 %v1161, %v1308
        %v1355 = vadd.f32 %v1162, %v1313
        %v1356 = vadd.f32 %v1163, %v1318
        %v1357 = vadd.f32 %v1164, %v1323
        %v1358 = vadd.f32 %v1165, %v1328
        %v1359 = vadd.f32 %v1166, %v1333
        %v1360 = vadd.f32 %v1167, %v1338
        %v1361 = vadd.f32 %v1168, %v1343
        %1362 = vst [vmem:[#allocation2] sm:$0xff] %v1346
        %1363 = vst [vmem:[#allocation2 + $0x8] sm:$0xff] %v1347
        %1364 = vst [vmem:[#allocation2 + $0x10] sm:$0xff] %v1348
        %1365 = vst [vmem:[#allocation2 + $0x18] sm:$0xff] %v1349
        %1366 = vst [vmem:[#allocation2 + $0x20] sm:$0xff] %v1350
        %1367 = vst [vmem:[#allocation2 + $0x28] sm:$0xff] %v1351
        %1368 = vst [vmem:[#allocation2 + $0x30] sm:$0xff] %v1352
        %1369 = vst [vmem:[#allocation2 + $0x38] sm:$0xff] %v1353
        %1370 = vst [vmem:[#allocation2 + $0x40] sm:$0xff] %v1354
        %1371 = vst [vmem:[#allocation2 + $0x48] sm:$0xff] %v1355
        %1372 = vst [vmem:[#allocation2 + $0x50] sm:$0xff] %v1356
        %1373 = vst [vmem:[#allocation2 + $0x58] sm:$0xff] %v1357
        %1374 = vst [vmem:[#allocation2 + $0x60] sm:$0xff] %v1358
        %1375 = vst [vmem:[#allocation2 + $0x68] sm:$0xff] %v1359
        %1376 = vst [vmem:[#allocation2 + $0x70] sm:$0xff] %v1360
        %1377 = vst [vmem:[#allocation2 + $0x78] sm:$0xff] %v1361
        %p1378 = scmp.eq.s32.totalorder %s33, 1
        // Predicated region
        $region61: #{tpu_custom_call.1} parent=39 // pred_check
          %p1379 = pneg %p1378
        $region62: #{tpu_custom_call.1} parent=39 // pred_check_branch
          %1381 = sbr.rel (%p1379) target = $region64
        $region63: #{tpu_custom_call.1} parent=39 // pred_region
          %v1382 = vld [vmem:[#allocation2] sm:$0xff]
          %v1383 = vld [vmem:[#allocation2 + $0x8] sm:$0xff]
          %v1384 = vld [vmem:[#allocation2 + $0x10] sm:$0xff]
          %v1385 = vld [vmem:[#allocation2 + $0x18] sm:$0xff]
          %v1386 = vld [vmem:[#allocation2 + $0x20] sm:$0xff]
          %v1387 = vld [vmem:[#allocation2 + $0x28] sm:$0xff]
          %v1388 = vld [vmem:[#allocation2 + $0x30] sm:$0xff]
          %v1389 = vld [vmem:[#allocation2 + $0x38] sm:$0xff]
          %v1390 = vld [vmem:[#allocation2 + $0x40] sm:$0xff]
          %v1391 = vld [vmem:[#allocation2 + $0x48] sm:$0xff]
          %v1392 = vld [vmem:[#allocation2 + $0x50] sm:$0xff]
          %v1393 = vld [vmem:[#allocation2 + $0x58] sm:$0xff]
          %v1394 = vld [vmem:[#allocation2 + $0x60] sm:$0xff]
          %v1395 = vld [vmem:[#allocation2 + $0x68] sm:$0xff]
          %v1396 = vld [vmem:[#allocation2 + $0x70] sm:$0xff]
          %v1397 = vld [vmem:[#allocation2 + $0x78] sm:$0xff]
          %v1398 = vld [vmem:[%s4] sm:$0x1]
          %v1400 = vlaneseq
          %v1401 = vshrl.u32 %v1400, 7
          %v1402 = vsub.s32 0, %v1401
          %v1403 = vrot.slane %v1398, %v1402
          %v1405 = vadd.f32 %v1382, %v1403
          %v1406 = vadd.f32 %v1383, %v1403
          %v1407 = vadd.f32 %v1384, %v1403
          %v1408 = vadd.f32 %v1385, %v1403
          %v1409 = vadd.f32 %v1386, %v1403
          %v1410 = vadd.f32 %v1387, %v1403
          %v1411 = vadd.f32 %v1388, %v1403
          %v1412 = vadd.f32 %v1389, %v1403
          %v1413 = vadd.f32 %v1390, %v1403
          %v1414 = vadd.f32 %v1391, %v1403
          %v1415 = vadd.f32 %v1392, %v1403
          %v1416 = vadd.f32 %v1393, %v1403
          %v1417 = vadd.f32 %v1394, %v1403
          %v1418 = vadd.f32 %v1395, %v1403
          %v1419 = vadd.f32 %v1396, %v1403
          %v1420 = vadd.f32 %v1397, %v1403
          %1421 = vst [vmem:[%s370] sm:$0xff] %v1405
          %1422 = vst [vmem:[%s370 + $0x8] sm:$0xff] %v1406
          %1423 = vst [vmem:[%s370 + $0x10] sm:$0xff] %v1407
          %1424 = vst [vmem:[%s370 + $0x18] sm:$0xff] %v1408
          %1425 = vst [vmem:[%s370 + $0x20] sm:$0xff] %v1409
          %1426 = vst [vmem:[%s370 + $0x28] sm:$0xff] %v1410
          %1427 = vst [vmem:[%s370 + $0x30] sm:$0xff] %v1411
          %1428 = vst [vmem:[%s370 + $0x38] sm:$0xff] %v1412
          %1429 = vst [vmem:[%s370 + $0x40] sm:$0xff] %v1413
          %1430 = vst [vmem:[%s370 + $0x48] sm:$0xff] %v1414
          %1431 = vst [vmem:[%s370 + $0x50] sm:$0xff] %v1415
          %1432 = vst [vmem:[%s370 + $0x58] sm:$0xff] %v1416
          %1433 = vst [vmem:[%s370 + $0x60] sm:$0xff] %v1417
          %1434 = vst [vmem:[%s370 + $0x68] sm:$0xff] %v1418
          %1435 = vst [vmem:[%s370 + $0x70] sm:$0xff] %v1419
          %1436 = vst [vmem:[%s370 + $0x78] sm:$0xff] %v1420
        $region64: #{tpu_custom_call.1} parent=39 // pred_fallthru
          _
        %s1437 = sand.u32 %s173, 1
        %s1438 = scalar_lea.sflag [#allocation5], %s1437
        %s1439 = sand.u32 %s173, 1
        %s1440 = smul.addr %s1439, 128
        %s1441 = scalar_lea.vmem [#allocation11], %s1440
        // Predicated region
        $region65: #{tpu_custom_call.1} parent=39 // pred_check
          %p1442 = pneg %p183
        $region66: #{tpu_custom_call.1} parent=39 // pred_check_branch
          %1444 = sbr.rel (%p1442) target = $region68
        $region67: #{tpu_custom_call.1} parent=39 // pred_region
          %s1445 = smul.u32 16, %s32
          %s1447 = ssub.s32 2048, 2048
          %1448 = vsyncadd %s1438, %s1447
          %s1449 = smul.addr %s1445, 128
          %s1450 = scalar_lea.hbm %s5, %s1449
          %s1451 = sshll.u32 %s1441, 4
          %s1452 = int_to_ptr.vmem [resolvable:$true] %s1451
          %1457 = dma.vmem_to_hbm [thread:$0]  %s1452, 2048, %s1450, %s1438, 128, 128, 8
        $region68: #{tpu_custom_call.1} parent=39 // pred_fallthru
          _
      $region40: #{tpu_custom_call.1} parent=5 // pred_fallthru
        _
      %p1458 = scmp.le.s32.totalorder 2, %s23
      // Predicated region
      $region69: #{tpu_custom_call.1} parent=5 // pred_check
        %p1459 = pneg %p1458
      $region70: #{tpu_custom_call.1} parent=5 // pred_check_branch
        %1461 = sbr.rel (%p1459) target = $region72
      $region71: #{tpu_custom_call.1} parent=5 // pred_region
        %s1462 = ssub.s32 %s23, 2
        // Predicated region
        $region73: #{tpu_custom_call.1} parent=71 // pred_check
          %p1463 = pneg %p189
        $region74: #{tpu_custom_call.1} parent=71 // pred_check_branch
          %1465 = sbr.rel (%p1463) target = $region76
        $region75: #{tpu_custom_call.1} parent=71 // pred_region
          %s1466 = sand.u32 %s174, 1
          %s1467 = scalar_lea.sflag [#allocation5], %s1466
          %s1468 = sand.u32 %s174, 1
          %s1469 = smul.addr %s1468, 128
          %s1470 = scalar_lea.vmem [#allocation11], %s1469
          %1471 = dma.done %s1467, 2048
        $region76: #{tpu_custom_call.1} parent=71 // pred_fallthru
          _
      $region72: #{tpu_custom_call.1} parent=5 // pred_fallthru
        _
    $region6: #{tpu_custom_call.1} parent=1 // loop_footer
      %s27 = sadd.s32 1, %s23
    $region7: #{tpu_custom_call.1} parent=1 // loop_footer_branch
      %22 = sbr.rel target = $region3
    $region8: #{tpu_custom_call.1} parent=1 // loop_exit
      _
    %1472 = vsyncpa [#allocation4], 1
    %s1473 = scalar_lea.sflag [#allocation4], 1
    %1474 = vsyncpa %s1473, 1
    %1475 = vsyncpa [#allocation7], 1
    %s1476 = scalar_lea.sflag [#allocation7], 1
    %1477 = vsyncpa %s1476, 1
    %1478 = vsyncpa [#allocation10], 1
    %s1479 = scalar_lea.sflag [#allocation10], 1
    %1480 = vsyncpa %s1479, 1
    %1481 = vsyncpa [#allocation5], 1
    %s1482 = scalar_lea.sflag [#allocation5], 1
    %1483 = vsyncpa %s1482, 1

</llo_original>
